<compile_context>
chip_gen: v7x
topology: tpu7x:2x2x1
jax: 0.10.0
libtpu: 0.0.40
codegen_flags: <defaults>
</compile_context>

<pallas_src>
import numpy as np
import jax
import jax.numpy as jnp
from jax.experimental import pallas as pl
from jax.experimental.pallas import tpu as pltpu

LANE = 128
SUBLANE_BF16 = 16  # bf16 packs 2 rows per sublane -> 16-row granularity


def _round_up(n, m):
    return ((n + m - 1) // m) * m


# ---------------------------------------------------------------------------
# Kernel: one batch tile (TB rows) through all 3 layers, weights resident.
# ---------------------------------------------------------------------------
def actor_kernel(x_ref, w1_ref, b1_ref, w2_ref, b2_ref, w3_ref, b3_ref, out_ref):
    # Layer 1: (TB, S) @ (S, H1p) + (1, H1p) -> tanh -> bf16
    h1 = jnp.tanh(
        jnp.dot(x_ref[...], w1_ref[...], preferred_element_type=jnp.float32)
        + b1_ref[...]
    ).astype(jnp.bfloat16)
    # Layer 2: (TB, H1p) @ (H1p, H2p) + (1, H2p) -> tanh -> bf16
    h2 = jnp.tanh(
        jnp.dot(h1, w2_ref[...], preferred_element_type=jnp.float32)
        + b2_ref[...]
    ).astype(jnp.bfloat16)
    # Layer 3: (TB, H2p) @ (H2p, Ap) + (1, Ap) -> tanh -> f32 out
    h3 = jnp.tanh(
        jnp.dot(h2, w3_ref[...], preferred_element_type=jnp.float32)
        + b3_ref[...]
    )
    out_ref[...] = h3.astype(out_ref.dtype)


# ---------------------------------------------------------------------------
# Wrapper
# ---------------------------------------------------------------------------
def actor_forward(x, prepped, action_size, block_b=512):
    """x: (B, state_size) f32/bf16.  prepped: padded/bf16 params from
    prepare_actor_params().  Returns (B, action_size) f32."""
    B, S = x.shape
    w1, b1 = prepped["w1"], prepped["b1"]
    w2, b2 = prepped["w2"], prepped["b2"]
    w3, b3 = prepped["w3"], prepped["b3"]
    assert w1.shape[0] == S, "state dim mismatch between x and prepared w1"
    H1p = w1.shape[1]
    H2p = w2.shape[1]
    Ap = w3.shape[1]

    # ---- batch tiling policy -------------------------------------------------
    # Bound padding waste (< 16 rows per tile) and give v7x's two TensorCores
    # at least 2 (and an even number of) parallel grid steps when possible.
    n_tiles = pl.cdiv(B, block_b)
    if _round_up(B, SUBLANE_BF16) >= 2 * SUBLANE_BF16:
        n_tiles = max(n_tiles, 2)
    if n_tiles > 1 and n_tiles % 2 == 1:
        n_tiles += 1
    TB = _round_up(pl.cdiv(B, n_tiles), SUBLANE_BF16)
    Bp = n_tiles * TB

    # Cast activations to bf16; pad batch rows only if needed (no state-dim pad).
    xp = x.astype(jnp.bfloat16)
    if Bp != B:
        xp = jnp.pad(xp, ((0, Bp - B), (0, 0)))

    out = pl.pallas_call(
        actor_kernel,
        out_shape=jax.ShapeDtypeStruct((Bp, Ap), jnp.float32),
        grid=(n_tiles,),
        in_specs=[
            pl.BlockSpec((TB, S), lambda i: (i, 0)),     # x tile (per step)
            pl.BlockSpec((S, H1p), lambda i: (0, 0)),    # weights/biases: same
            pl.BlockSpec((1, H1p), lambda i: (0, 0)),    #  block every step ->
            pl.BlockSpec((H1p, H2p), lambda i: (0, 0)),  #  VMEM-resident,
            pl.BlockSpec((1, H2p), lambda i: (0, 0)),    #  DMA'd once.
            pl.BlockSpec((H2p, Ap), lambda i: (0, 0)),
            pl.BlockSpec((1, Ap), lambda i: (0, 0)),
        ],
        out_specs=pl.BlockSpec((TB, Ap), lambda i: (i, 0)),
        compiler_params=pltpu.CompilerParams(
            dimension_semantics=("parallel",),  # split batch across v7x TCs
        ),
    )(xp, w1, b1, w2, b2, w3, b3)

    return out[:B, :action_size]


# ---------------------------------------------------------------------------
# Parameter init (mirrors the PyTorch module) + padding/casting for the kernel
# ---------------------------------------------------------------------------
def init_actor_params(state_size, action_size, key):
    """Deterministic init mirroring the PyTorch module's reset_parameters().

    Hidden layers: weight ~ U(-1/sqrt(out_features), 1/sqrt(out_features))
    (hidden_init uses weight.size(0) == out_features).
    Last layer: weight ~ U(-3e-3, 3e-3).
    Biases keep default nn.Linear init: U(-1/sqrt(in_features), 1/sqrt(in_features)).
    Weights stored transposed vs PyTorch, i.e. (in_features, out_features).
    """
    sizes = [state_size, 600, 400, action_size]
    keys = jax.random.split(key, 6)
    params = {}
    for i in range(3):
        fan_in, fan_out = sizes[i], sizes[i + 1]
        w_lim = (1.0 / np.sqrt(fan_out)) if i < 2 else 3e-3
        b_lim = 1.0 / np.sqrt(fan_in)
        params[f"w{i+1}"] = jax.random.uniform(
            keys[2 * i], (fan_in, fan_out), jnp.float32, -w_lim, w_lim)
        params[f"b{i+1}"] = jax.random.uniform(
            keys[2 * i + 1], (1, fan_out), jnp.float32, -b_lim, b_lim)
    return params


def prepare_actor_params(raw):
    """Pad hidden/output feature dims up to 128-lane multiples (zeros) and cast
    the weights to bf16 (biases stay f32).  The state dim is NOT padded.  Done
    once, reused across calls."""
    S, H1 = raw["w1"].shape
    H2 = raw["w2"].shape[1]
    A = raw["w3"].shape[1]
    H1p, H2p, Ap = (_round_up(d, LANE) for d in (H1, H2, A))

    def pad_w(w, rows, cols):
        out = jnp.zeros((rows, cols), jnp.bfloat16)
        return out.at[: w.shape[0], : w.shape[1]].set(w.astype(jnp.bfloat16))

    def pad_b(b, cols):
        out = jnp.zeros((1, cols), jnp.float32)
        return out.at[:, : b.shape[1]].set(b.astype(jnp.float32))

    return {
        "w1": pad_w(raw["w1"], S, H1p),   "b1": pad_b(raw["b1"], H1p),
        "w2": pad_w(raw["w2"], H1p, H2p), "b2": pad_b(raw["b2"], H2p),
        "w3": pad_w(raw["w3"], H2p, Ap),  "b3": pad_b(raw["b3"], Ap),
    }


def actor_forward_ref(x, raw_params):
    """Pure-JAX f32 reference matching the PyTorch forward()."""
    h = x
    for i in range(1, 4):
        h = jnp.tanh(h @ raw_params[f"w{i}"] + raw_params[f"b{i}"])
    return h


if __name__ == "__main__":
    state_size = 32
    action_size = 8
    batch = 2

    key = jax.random.PRNGKey(0)
    k_params, k_x, k_x2 = jax.random.split(key, 3)

    raw = init_actor_params(state_size, action_size, k_params)
    prepped = prepare_actor_params(raw)

    # Small-batch check (B=2 -> single 16-row tile).
    x = jax.random.normal(k_x, (batch, state_size), dtype=jnp.float32)
    out = jax.block_until_ready(actor_forward(x, prepped, action_size))
    ref = actor_forward_ref(x, raw)
    np.testing.assert_allclose(np.asarray(out), np.asarray(ref),
                               rtol=2e-2, atol=2e-2)  # bf16 weights/activations
    assert out.shape == (batch, action_size)

    # Multi-tile grid path (B=300 -> 2 tiles of 160, Bp=320; both TCs busy on v7x).
    x2 = jax.random.normal(k_x2, (300, state_size), dtype=jnp.float32)
    out2 = jax.block_until_ready(actor_forward(x2, prepped, action_size))
    ref2 = actor_forward_ref(x2, raw)
    np.testing.assert_allclose(np.asarray(out2), np.asarray(ref2),
                               rtol=2e-2, atol=2e-2)
    assert out2.shape == (300, action_size)

    print("KERNEL_OK")
</pallas_src>

<mosaic_0001>
module attributes {stable_mosaic.version = 11 : i64} {
  func.func @actor_kernel(%arg0: i32, %arg1: memref<16x32xbf16, #tpu.memory_space<vmem>>, %arg2: memref<32x640xbf16, #tpu.memory_space<vmem>>, %arg3: memref<1x640xf32, #tpu.memory_space<vmem>>, %arg4: memref<640x512xbf16, #tpu.memory_space<vmem>>, %arg5: memref<1x512xf32, #tpu.memory_space<vmem>>, %arg6: memref<512x128xbf16, #tpu.memory_space<vmem>>, %arg7: memref<1x128xf32, #tpu.memory_space<vmem>>, %arg8: memref<16x128xf32, #tpu.memory_space<vmem>>) attributes {dimension_semantics = [#tpu.dimension_semantics<parallel>], iteration_bounds = array<i64: 1>, scalar_prefetch = 0 : i64, scratch_operands = 0 : i64, tpu.core_type = #tpu.core_type<tc>, window_params = [{transform_indices = @transform_0, window_bounds = array<i64: 16, 32>}, {pipeline_mode = #tpu.pipeline_mode<synchronous>, transform_indices = @transform_1, window_bounds = array<i64: 32, 640>}, {pipeline_mode = #tpu.pipeline_mode<synchronous>, transform_indices = @transform_2, window_bounds = array<i64: 1, 640>}, {pipeline_mode = #tpu.pipeline_mode<synchronous>, transform_indices = @transform_3, window_bounds = array<i64: 640, 512>}, {pipeline_mode = #tpu.pipeline_mode<synchronous>, transform_indices = @transform_4, window_bounds = array<i64: 1, 512>}, {pipeline_mode = #tpu.pipeline_mode<synchronous>, transform_indices = @transform_5, window_bounds = array<i64: 512, 128>}, {pipeline_mode = #tpu.pipeline_mode<synchronous>, transform_indices = @transform_6, window_bounds = array<i64: 1, 128>}, {transform_indices = @transform_7, window_bounds = array<i64: 16, 128>}]} {
    %c0 = arith.constant 0 : index
    %c0_0 = arith.constant 0 : index
    %0 = vector.load %arg1[%c0, %c0_0] : memref<16x32xbf16, #tpu.memory_space<vmem>>, vector<16x32xbf16>
    %c0_1 = arith.constant 0 : index
    %c0_2 = arith.constant 0 : index
    %1 = vector.load %arg2[%c0_1, %c0_2] : memref<32x640xbf16, #tpu.memory_space<vmem>>, vector<32x640xbf16>
    %cst = arith.constant dense<0.000000e+00> : vector<16x640xf32>
    %2 = tpu.matmul %0, %1, %cst {dimension_numbers = #tpu.dot_dimension_numbers<[1], [0], [0], [1], [0, 0, 1, 1], [], []>} : vector<16x32xbf16>, vector<32x640xbf16>, vector<16x640xf32> -> vector<16x640xf32>
    %c0_3 = arith.constant 0 : index
    %c0_4 = arith.constant 0 : index
    %3 = vector.load %arg3[%c0_3, %c0_4] : memref<1x640xf32, #tpu.memory_space<vmem>>, vector<1x640xf32>
    %4 = vector.broadcast %3 : vector<1x640xf32> to vector<16x640xf32>
    %5 = arith.addf %2, %4 : vector<16x640xf32>
    %6 = math.tanh %5 : vector<16x640xf32>
    %7 = arith.truncf %6 : vector<16x640xf32> to vector<16x640xbf16>
    %c0_5 = arith.constant 0 : index
    %c0_6 = arith.constant 0 : index
    %8 = vector.load %arg4[%c0_5, %c0_6] : memref<640x512xbf16, #tpu.memory_space<vmem>>, vector<640x512xbf16>
    %cst_7 = arith.constant dense<0.000000e+00> : vector<16x512xf32>
    %9 = tpu.matmul %7, %8, %cst_7 {dimension_numbers = #tpu.dot_dimension_numbers<[1], [0], [0], [1], [0, 0, 1, 1], [], []>} : vector<16x640xbf16>, vector<640x512xbf16>, vector<16x512xf32> -> vector<16x512xf32>
    %c0_8 = arith.constant 0 : index
    %c0_9 = arith.constant 0 : index
    %10 = vector.load %arg5[%c0_8, %c0_9] : memref<1x512xf32, #tpu.memory_space<vmem>>, vector<1x512xf32>
    %11 = vector.broadcast %10 : vector<1x512xf32> to vector<16x512xf32>
    %12 = arith.addf %9, %11 : vector<16x512xf32>
    %13 = math.tanh %12 : vector<16x512xf32>
    %14 = arith.truncf %13 : vector<16x512xf32> to vector<16x512xbf16>
    %c0_10 = arith.constant 0 : index
    %c0_11 = arith.constant 0 : index
    %15 = vector.load %arg6[%c0_10, %c0_11] : memref<512x128xbf16, #tpu.memory_space<vmem>>, vector<512x128xbf16>
    %cst_12 = arith.constant dense<0.000000e+00> : vector<16x128xf32>
    %16 = tpu.matmul %14, %15, %cst_12 {dimension_numbers = #tpu.dot_dimension_numbers<[1], [0], [0], [1], [0, 0, 1, 1], [], []>} : vector<16x512xbf16>, vector<512x128xbf16>, vector<16x128xf32> -> vector<16x128xf32>
    %c0_13 = arith.constant 0 : index
    %c0_14 = arith.constant 0 : index
    %17 = vector.load %arg7[%c0_13, %c0_14] : memref<1x128xf32, #tpu.memory_space<vmem>>, vector<1x128xf32>
    %18 = vector.broadcast %17 : vector<1x128xf32> to vector<16x128xf32>
    %19 = arith.addf %16, %18 : vector<16x128xf32>
    %20 = math.tanh %19 : vector<16x128xf32>
    %c0_15 = arith.constant 0 : index
    %c0_16 = arith.constant 0 : index
    %21 = vector.load %arg8[%c0_15, %c0_16] : memref<16x128xf32, #tpu.memory_space<vmem>>, vector<16x128xf32>
    tpu.vector_store %arg8[%c0_15, %c0_16], %20 {strides = array<i32>} : memref<16x128xf32, #tpu.memory_space<vmem>>, vector<16x128xf32>,
    return
  }
  func.func @transform_0(%arg0: i32) -> (i32, i32) {
    %c0_i32 = arith.constant 0 : i32
    %c0_i32_0 = arith.constant 0 : i32
    return %arg0, %c0_i32 : i32, i32
  }
  func.func @transform_1(%arg0: i32) -> (i32, i32) {
    %c0_i32 = arith.constant 0 : i32
    %c0_i32_0 = arith.constant 0 : i32
    %c0_i32_1 = arith.constant 0 : i32
    return %c0_i32, %c0_i32_0 : i32, i32
  }
  func.func @transform_2(%arg0: i32) -> (i32, i32) {
    %c0_i32 = arith.constant 0 : i32
    %c0_i32_0 = arith.constant 0 : i32
    %c0_i32_1 = arith.constant 0 : i32
    return %c0_i32, %c0_i32_0 : i32, i32
  }
  func.func @transform_3(%arg0: i32) -> (i32, i32) {
    %c0_i32 = arith.constant 0 : i32
    %c0_i32_0 = arith.constant 0 : i32
    %c0_i32_1 = arith.constant 0 : i32
    return %c0_i32, %c0_i32_0 : i32, i32
  }
  func.func @transform_4(%arg0: i32) -> (i32, i32) {
    %c0_i32 = arith.constant 0 : i32
    %c0_i32_0 = arith.constant 0 : i32
    %c0_i32_1 = arith.constant 0 : i32
    return %c0_i32, %c0_i32_0 : i32, i32
  }
  func.func @transform_5(%arg0: i32) -> (i32, i32) {
    %c0_i32 = arith.constant 0 : i32
    %c0_i32_0 = arith.constant 0 : i32
    %c0_i32_1 = arith.constant 0 : i32
    return %c0_i32, %c0_i32_0 : i32, i32
  }
  func.func @transform_6(%arg0: i32) -> (i32, i32) {
    %c0_i32 = arith.constant 0 : i32
    %c0_i32_0 = arith.constant 0 : i32
    %c0_i32_1 = arith.constant 0 : i32
    return %c0_i32, %c0_i32_0 : i32, i32
  }
  func.func @transform_7(%arg0: i32) -> (i32, i32) {
    %c0_i32 = arith.constant 0 : i32
    %c0_i32_0 = arith.constant 0 : i32
    return %arg0, %c0_i32 : i32, i32
  }
}

</mosaic_0001>

<llo_original>
// kernel: tpu_custom_call.1
$region0: #{tpu_custom_call.1}
  #allocation0 [shape = 'u32[]', space=smem, size = 0x4, offset = 0x4, fixed_abs, tag = 'smem constant byte address 0x4 - core index']
  #allocation1 [shape = 'u32[144,128]{1,0:T(1,128)}', space=vmem, size = 0x12000, scoped, tag = 'internal scratch']
  %s0 = inlined_call_operand.hbm [shape: bf16[16,32], index: 0, kind: input, shape index: {}]
  %s1 = inlined_call_operand.hbm [shape: bf16[32,640], index: 1, kind: input, shape index: {}]
  %s2 = inlined_call_operand.vmem [shape: f32[1,640], index: 2, kind: input, shape index: {}]
  %s3 = inlined_call_operand.hbm [shape: bf16[640,512], index: 3, kind: input, shape index: {}]
  %s4 = inlined_call_operand.vmem [shape: f32[1,512], index: 4, kind: input, shape index: {}]
  %s5 = inlined_call_operand.hbm [shape: bf16[512,128], index: 5, kind: input, shape index: {}]
  %s6 = inlined_call_operand.vmem [shape: f32[1,128], index: 6, kind: input, shape index: {}]
  %s7 = inlined_call_operand.hbm [shape: f32[16,128], index: 7, kind: output, shape index: {}]
  %s8 = sld [smem:[#allocation0]]
  $region54: #{tpu_custom_call.1} parent=0
    _
  %s10 = ssub.s32 1, %s8
  %s11 = scalar_select 0, %s10, %s8
  $region1: #{tpu_custom_call.1} parent=0
    #allocation2 [shape = 'u8[4096]{0}', space=vmem, size = 0x1000, scoped, tag = 'input window, operand 0, single buffered']
    #allocation3 [shape = 's32[1]{0}', space=sflag, size = 0x4, scoped, tag = 'scoped memory for tpu_custom_call.1']
    #allocation4 [shape = 's32[1]{0}', space=sflag, size = 0x4, scoped, tag = 'scoped memory for tpu_custom_call.1']
    #allocation5 [shape = 'u8[40960]{0}', space=vmem, size = 0xa000, scoped, tag = 'input window, operand 1, single buffered']
    #allocation6 [shape = 's32[1]{0}', space=sflag, size = 0x4, scoped, tag = 'scoped memory for tpu_custom_call.1']
    #allocation7 [shape = 'u8[655360]{0}', space=vmem, size = 0xa0000, scoped, tag = 'input window, operand 3, single buffered']
    #allocation8 [shape = 'u8[131072]{0}', space=vmem, size = 0x20000, scoped, tag = 'input window, operand 5, single buffered']
    #allocation9 [shape = 's32[1]{0}', space=sflag, size = 0x4, scoped, tag = 'scoped memory for tpu_custom_call.1']
    #allocation10 [shape = 'u8[8192]{0}', space=vmem, size = 0x2000, scoped, tag = 'output window, operand 0, single buffered']
    %12 = vsyncpa [#allocation3], 0
    %13 = vsyncpa [#allocation6], 0
    %14 = vsyncpa [#allocation9], 0
    %15 = vsyncpa [#allocation4], 0
    // Predicated region
    $region2: #{tpu_custom_call.1} parent=1 // pred_check
      _
    $region3: #{tpu_custom_call.1} parent=1 // pred_check_branch
      %17 = sbr.rel (0) target = $region5
    $region4: #{tpu_custom_call.1} parent=1 // pred_region
      %s19 = ssub.s32 128, 128
      %20 = vsyncadd [#allocation3], %s19
      %s21 = sshll.u32 [#allocation2], 4
      %s22 = int_to_ptr.vmem [resolvable:$true] %s21
      %27 = dma.hbm_to_vmem [thread:$0]  %s0, 128, %s22, [#allocation3], 64, 64, 4
    $region5: #{tpu_custom_call.1} parent=1 // pred_fallthru
      _
    // Predicated region
    $region6: #{tpu_custom_call.1} parent=1 // pred_check
      _
    $region7: #{tpu_custom_call.1} parent=1 // pred_check_branch
      %29 = sbr.rel (0) target = $region9
    $region8: #{tpu_custom_call.1} parent=1 // pred_region
      %s31 = ssub.s32 1280, 1280
      %32 = vsyncadd [#allocation6], %s31
      %s33 = sshll.u32 [#allocation5], 4
      %s34 = int_to_ptr.vmem [resolvable:$true] %s33
      %39 = dma.hbm_to_vmem [thread:$0]  %s1, 1280, %s34, [#allocation6], 320, 320, 20
    $region9: #{tpu_custom_call.1} parent=1 // pred_fallthru
      _
    // Predicated region
    $region10: #{tpu_custom_call.1} parent=1 // pred_check
      _
    $region11: #{tpu_custom_call.1} parent=1 // pred_check_branch
      %41 = sbr.rel (0) target = $region13
    $region12: #{tpu_custom_call.1} parent=1 // pred_region
      _
    $region13: #{tpu_custom_call.1} parent=1 // pred_fallthru
      _
    // Predicated region
    $region14: #{tpu_custom_call.1} parent=1 // pred_check
      _
    $region15: #{tpu_custom_call.1} parent=1 // pred_check_branch
      %43 = sbr.rel (0) target = $region17
    $region16: #{tpu_custom_call.1} parent=1 // pred_region
      %s45 = ssub.s32 20480, 20480
      %46 = vsyncadd [#allocation6], %s45
      %s47 = sshll.u32 [#allocation7], 4
      %s48 = int_to_ptr.vmem [resolvable:$true] %s47
      %53 = dma.hbm_to_vmem [thread:$0]  %s3, 20480, %s48, [#allocation6], 256, 256, 16
    $region17: #{tpu_custom_call.1} parent=1 // pred_fallthru
      _
    // Predicated region
    $region18: #{tpu_custom_call.1} parent=1 // pred_check
      _
    $region19: #{tpu_custom_call.1} parent=1 // pred_check_branch
      %55 = sbr.rel (0) target = $region21
    $region20: #{tpu_custom_call.1} parent=1 // pred_region
      _
    $region21: #{tpu_custom_call.1} parent=1 // pred_fallthru
      _
    // Predicated region
    $region22: #{tpu_custom_call.1} parent=1 // pred_check
      _
    $region23: #{tpu_custom_call.1} parent=1 // pred_check_branch
      %57 = sbr.rel (0) target = $region25
    $region24: #{tpu_custom_call.1} parent=1 // pred_region
      %s59 = ssub.s32 4096, 4096
      %60 = vsyncadd [#allocation9], %s59
      %s61 = sshll.u32 [#allocation8], 4
      %s62 = int_to_ptr.vmem [resolvable:$true] %s61
      %67 = dma.hbm_to_vmem [thread:$0]  %s5, 4096, %s62, [#allocation9], 64, 64, 4
    $region25: #{tpu_custom_call.1} parent=1 // pred_fallthru
      _
    // Predicated region
    $region26: #{tpu_custom_call.1} parent=1 // pred_check
      _
    $region27: #{tpu_custom_call.1} parent=1 // pred_check_branch
      %69 = sbr.rel (0) target = $region29
    $region28: #{tpu_custom_call.1} parent=1 // pred_region
      _
    $region29: #{tpu_custom_call.1} parent=1 // pred_fallthru
      _
    // Predicated region
    $region30: #{tpu_custom_call.1} parent=1 // pred_check
      _
    $region31: #{tpu_custom_call.1} parent=1 // pred_check_branch
      %71 = sbr.rel (0) target = $region33
    $region32: #{tpu_custom_call.1} parent=1 // pred_region
      %72 = dma.done [#allocation3], 128
    $region33: #{tpu_custom_call.1} parent=1 // pred_fallthru
      _
    // Predicated region
    $region34: #{tpu_custom_call.1} parent=1 // pred_check
      _
    $region35: #{tpu_custom_call.1} parent=1 // pred_check_branch
      %74 = sbr.rel (0) target = $region37
    $region36: #{tpu_custom_call.1} parent=1 // pred_region
      %75 = dma.done [#allocation6], 1280
    $region37: #{tpu_custom_call.1} parent=1 // pred_fallthru
      _
    // Predicated region
    $region38: #{tpu_custom_call.1} parent=1 // pred_check
      _
    $region39: #{tpu_custom_call.1} parent=1 // pred_check_branch
      %77 = sbr.rel (0) target = $region41
    $region40: #{tpu_custom_call.1} parent=1 // pred_region
      %78 = dma.done [#allocation6], 20480
    $region41: #{tpu_custom_call.1} parent=1 // pred_fallthru
      _
    // Predicated region
    $region42: #{tpu_custom_call.1} parent=1 // pred_check
      _
    $region43: #{tpu_custom_call.1} parent=1 // pred_check_branch
      %80 = sbr.rel (0) target = $region45
    $region44: #{tpu_custom_call.1} parent=1 // pred_region
      %81 = dma.done [#allocation9], 4096
    $region45: #{tpu_custom_call.1} parent=1 // pred_fallthru
      _
    %v83 = vld [vmem:[#allocation2] sm:$0xf]
    %v84 = vld [vmem:[#allocation2 + $0x4] sm:$0xf]
    %v85 = vld [vmem:[#allocation5] sm:$0xff]
    %v86 = vld [vmem:[#allocation5 + $0x8] sm:$0xff]
    %v87 = vld [vmem:[#allocation5 + $0x10] sm:$0xf]
    %v88 = vld [vmem:[#allocation5 + $0x14] sm:$0xff]
    %v89 = vld [vmem:[#allocation5 + $0x1c] sm:$0xff]
    %v90 = vld [vmem:[#allocation5 + $0x24] sm:$0xf]
    %v91 = vld [vmem:[#allocation5 + $0x28] sm:$0xff]
    %v92 = vld [vmem:[#allocation5 + $0x30] sm:$0xff]
    %v93 = vld [vmem:[#allocation5 + $0x38] sm:$0xf]
    %v94 = vld [vmem:[#allocation5 + $0x3c] sm:$0xff]
    %v95 = vld [vmem:[#allocation5 + $0x44] sm:$0xff]
    %v96 = vld [vmem:[#allocation5 + $0x4c] sm:$0xf]
    %v97 = vld [vmem:[%s2] sm:$0x1f]
    %v99 = vlaneseq
    %v100 = vshrl.u32 %v99, 7
    %v101 = vsub.s32 0, %v100
    %v102 = vrot.slane %v97, %v101
    %v103 = vlaneseq
    %v104 = vshrl.u32 %v103, 7
    %v105 = vsub.s32 1, %v104
    %v106 = vrot.slane %v97, %v105
    %v107 = vlaneseq
    %v108 = vshrl.u32 %v107, 7
    %v109 = vsub.s32 2, %v108
    %v110 = vrot.slane %v97, %v109
    %v111 = vlaneseq
    %v112 = vshrl.u32 %v111, 7
    %v113 = vsub.s32 3, %v112
    %v114 = vrot.slane %v97, %v113
    %v115 = vlaneseq
    %v116 = vshrl.u32 %v115, 7
    %v117 = vsub.s32 4, %v116
    %v118 = vrot.slane %v97, %v117
    %v126 = vunpack.c.l.b16 %v83
    %v127 = vunpack.c.l.b16 %v84
    %v128 = vpack.c.b16 %v127, %v126
    %v141 = vunpack.c.l.b16 %v85
    %v142 = vunpack.c.h.b16 %v85
    %v143 = vunpack.c.l.b16 %v86
    %v144 = vunpack.c.h.b16 %v86
    %v145 = vunpack.c.l.b16 %v87
    %v146 = vunpack.c.l.b16 %v88
    %v147 = vunpack.c.h.b16 %v88
    %v148 = vunpack.c.l.b16 %v89
    %v149 = vunpack.c.h.b16 %v89
    %v150 = vunpack.c.l.b16 %v90
    %v151 = vunpack.c.l.b16 %v91
    %v152 = vunpack.c.h.b16 %v91
    %v153 = vunpack.c.l.b16 %v92
    %v154 = vunpack.c.h.b16 %v92
    %v155 = vunpack.c.l.b16 %v93
    %v156 = vunpack.c.l.b16 %v94
    %v157 = vunpack.c.h.b16 %v94
    %v158 = vunpack.c.l.b16 %v95
    %v159 = vunpack.c.h.b16 %v95
    %v160 = vunpack.c.l.b16 %v96
    %v161 = vpack.c.b16 %v146, %v141
    %v162 = vpack.c.b16 %v147, %v142
    %v163 = vpack.c.b16 %v148, %v143
    %v164 = vpack.c.b16 %v149, %v144
    %v165 = vpack.c.b16 %v150, %v145
    %v166 = vpack.c.b16 %v156, %v151
    %v167 = vpack.c.b16 %v157, %v152
    %v168 = vpack.c.b16 %v158, %v153
    %v169 = vpack.c.b16 %v159, %v154
    %v170 = vpack.c.b16 %v160, %v155
    %vm181 = vcmask 261120
    %v183 = vsel %vm181, %v128, 0
    %185 = vmatprep.subr.bf16.mxu0 %v162
    %186 = vmatpush1.bf16.msra.mxu0 %v161
    %187 = vmatprep.subr.bf16.mxu0 %v167
    %188 = vmatpush1.bf16.msra.mxu0 %v166
    %189 = vmatprep.subr.bf16.mxu0 0
    %190 = vmatpush1.bf16.msra.mxu0 0
    %191 = vmatprep.subr.bf16.mxu0 0
    %192 = vmatpush1.bf16.msra.mxu0 0
    %193 = vmatprep.subr.bf16.mxu0 0
    %194 = vmatpush1.bf16.msra.mxu0 0
    %195 = vmatprep.subr.bf16.mxu0 0
    %196 = vmatpush1.bf16.msra.mxu0 0
    %197 = vmatprep.subr.bf16.mxu0 0
    %198 = vmatpush1.bf16.msra.mxu0 0
    %199 = vmatprep.subr.bf16.mxu0 0
    %200 = vmatpush1.bf16.msra.mxu0 0
    %201 = vmatprep.subr.bf16.mxu0 0
    %202 = vmatpush1.bf16.msra.mxu0 0
    %203 = vmatprep.subr.bf16.mxu0 0
    %204 = vmatpush1.bf16.msra.mxu0 0
    %205 = vmatprep.subr.bf16.mxu0 0
    %206 = vmatpush1.bf16.msra.mxu0 0
    %207 = vmatprep.subr.bf16.mxu0 0
    %208 = vmatpush1.bf16.msra.mxu0 0
    %209 = vmatprep.subr.bf16.mxu0 0
    %210 = vmatpush1.bf16.msra.mxu0 0
    %211 = vmatprep.subr.bf16.mxu0 0
    %212 = vmatpush1.bf16.msra.mxu0 0
    %213 = vmatprep.subr.bf16.mxu0 0
    %214 = vmatpush1.bf16.msra.mxu0 0
    %215 = vmatprep.subr.bf16.mxu0 0
    %216 = vmatpush1.bf16.msra.mxu0 0
    %217 = vmatprep.mubr.bf16.mxu0 0
    %218 = vmatmul.mubr.bf16.gmra.mrb[0].mxu0 %v183
    %v219 = vpop.f32.mrb[0].mxu0
    %v220 = vadd.f32 %v102, %v219
    %v221 = vpop.f32.mrb[0].mxu0
    %v222 = vadd.f32 %v106, %v221
    %v223 = vpop.f32.mrb[0].mxu0
    %v224 = vadd.f32 %v102, %v223
    %v225 = vpop.f32.mrb[0].mxu0
    %v226 = vadd.f32 %v106, %v225
    %227 = vdwg.mxu0
    %228 = vmatprep.subr.bf16.mxu0 %v164
    %229 = vmatpush1.bf16.msra.mxu0 %v163
    %230 = vmatprep.subr.bf16.mxu0 %v169
    %231 = vmatpush1.bf16.msra.mxu0 %v168
    %232 = vmatprep.subr.bf16.mxu0 0
    %233 = vmatpush1.bf16.msra.mxu0 0
    %234 = vmatprep.subr.bf16.mxu0 0
    %235 = vmatpush1.bf16.msra.mxu0 0
    %236 = vmatprep.subr.bf16.mxu0 0
    %237 = vmatpush1.bf16.msra.mxu0 0
    %238 = vmatprep.subr.bf16.mxu0 0
    %239 = vmatpush1.bf16.msra.mxu0 0
    %240 = vmatprep.subr.bf16.mxu0 0
    %241 = vmatpush1.bf16.msra.mxu0 0
    %242 = vmatprep.subr.bf16.mxu0 0
    %243 = vmatpush1.bf16.msra.mxu0 0
    %244 = vmatprep.subr.bf16.mxu0 0
    %245 = vmatpush1.bf16.msra.mxu0 0
    %246 = vmatprep.subr.bf16.mxu0 0
    %247 = vmatpush1.bf16.msra.mxu0 0
    %248 = vmatprep.subr.bf16.mxu0 0
    %249 = vmatpush1.bf16.msra.mxu0 0
    %250 = vmatprep.subr.bf16.mxu0 0
    %251 = vmatpush1.bf16.msra.mxu0 0
    %252 = vmatprep.subr.bf16.mxu0 0
    %253 = vmatpush1.bf16.msra.mxu0 0
    %254 = vmatprep.subr.bf16.mxu0 0
    %255 = vmatpush1.bf16.msra.mxu0 0
    %256 = vmatprep.subr.bf16.mxu0 0
    %257 = vmatpush1.bf16.msra.mxu0 0
    %258 = vmatprep.subr.bf16.mxu0 0
    %259 = vmatpush1.bf16.msra.mxu0 0
    %260 = vmatprep.mubr.bf16.mxu0 0
    %261 = vmatmul.mubr.bf16.gmra.mrb[0].mxu0 %v183
    %v262 = vpop.f32.mrb[0].mxu0
    %v263 = vadd.f32 %v110, %v262
    %v264 = vpop.f32.mrb[0].mxu0
    %v265 = vadd.f32 %v114, %v264
    %v266 = vpop.f32.mrb[0].mxu0
    %v267 = vadd.f32 %v110, %v266
    %v268 = vpop.f32.mrb[0].mxu0
    %v269 = vadd.f32 %v114, %v268
    %270 = vdwg.mxu0
    %271 = vmatprep.subr.bf16.mxu0 0
    %272 = vmatpush1.bf16.msra.mxu0 %v165
    %273 = vmatprep.subr.bf16.mxu0 0
    %274 = vmatpush1.bf16.msra.mxu0 %v170
    %275 = vmatprep.subr.bf16.mxu0 0
    %276 = vmatpush1.bf16.msra.mxu0 0
    %277 = vmatprep.subr.bf16.mxu0 0
    %278 = vmatpush1.bf16.msra.mxu0 0
    %279 = vmatprep.subr.bf16.mxu0 0
    %280 = vmatpush1.bf16.msra.mxu0 0
    %281 = vmatprep.subr.bf16.mxu0 0
    %282 = vmatpush1.bf16.msra.mxu0 0
    %283 = vmatprep.subr.bf16.mxu0 0
    %284 = vmatpush1.bf16.msra.mxu0 0
    %285 = vmatprep.subr.bf16.mxu0 0
    %286 = vmatpush1.bf16.msra.mxu0 0
    %287 = vmatprep.subr.bf16.mxu0 0
    %288 = vmatpush1.bf16.msra.mxu0 0
    %289 = vmatprep.subr.bf16.mxu0 0
    %290 = vmatpush1.bf16.msra.mxu0 0
    %291 = vmatprep.subr.bf16.mxu0 0
    %292 = vmatpush1.bf16.msra.mxu0 0
    %293 = vmatprep.subr.bf16.mxu0 0
    %294 = vmatpush1.bf16.msra.mxu0 0
    %295 = vmatprep.subr.bf16.mxu0 0
    %296 = vmatpush1.bf16.msra.mxu0 0
    %297 = vmatprep.subr.bf16.mxu0 0
    %298 = vmatpush1.bf16.msra.mxu0 0
    %299 = vmatprep.subr.bf16.mxu0 0
    %300 = vmatpush1.bf16.msra.mxu0 0
    %301 = vmatprep.subr.bf16.mxu0 0
    %302 = vmatpush1.bf16.msra.mxu0 0
    %303 = vmatprep.mubr.bf16.mxu0 0
    %304 = vmatmul.mubr.bf16.gmra.mrb[0].mxu0 %v183
    %v305 = vpop.f32.mrb[0].mxu0
    %v306 = vadd.f32 %v118, %v305
    %v307 = vpop.f32.mrb[0].mxu0
    %v308 = vpop.f32.mrb[0].mxu0
    %v309 = vadd.f32 %v118, %v308
    %v310 = vpop.f32.mrb[0].mxu0
    %311 = vdwg.mxu0
    %v312 = vtanh.pop %v220
    %v313 = vtanh.pop %v222
    %v314 = vtanh.pop %v263
    %v315 = vtanh.pop %v265
    %v316 = vtanh.pop %v306
    %v317 = vtanh.pop %v224
    %v318 = vtanh.pop %v226
    %v319 = vtanh.pop %v267
    %v320 = vtanh.pop %v269
    %v321 = vtanh.pop %v309
    %v322 = vpack.c.bf16 %v317, %v312
    %v323 = vpack.c.bf16 %v318, %v313
    %v324 = vpack.c.bf16 %v319, %v314
    %v325 = vpack.c.bf16 %v320, %v315
    %v326 = vpack.c.bf16 %v321, %v316
    %v327 = vld [vmem:[#allocation7] sm:$0xff]
    %v328 = vld [vmem:[#allocation7 + $0x8] sm:$0xff]
    %v329 = vld [vmem:[#allocation7 + $0x10] sm:$0xff]
    %v330 = vld [vmem:[#allocation7 + $0x18] sm:$0xff]
    %v331 = vld [vmem:[#allocation7 + $0x20] sm:$0xff]
    %v332 = vld [vmem:[#allocation7 + $0x28] sm:$0xff]
    %v333 = vld [vmem:[#allocation7 + $0x30] sm:$0xff]
    %v334 = vld [vmem:[#allocation7 + $0x38] sm:$0xff]
    %v335 = vld [vmem:[#allocation7 + $0x40] sm:$0xff]
    %v336 = vld [vmem:[#allocation7 + $0x48] sm:$0xff]
    %v337 = vld [vmem:[#allocation7 + $0x50] sm:$0xff]
    %v338 = vld [vmem:[#allocation7 + $0x58] sm:$0xff]
    %v339 = vld [vmem:[#allocation7 + $0x60] sm:$0xff]
    %v340 = vld [vmem:[#allocation7 + $0x68] sm:$0xff]
    %v341 = vld [vmem:[#allocation7 + $0x70] sm:$0xff]
    %v342 = vld [vmem:[#allocation7 + $0x78] sm:$0xff]
    %v343 = vld [vmem:[#allocation7 + $0x80] sm:$0xff]
    %v344 = vld [vmem:[#allocation7 + $0x88] sm:$0xff]
    %v345 = vld [vmem:[#allocation7 + $0x90] sm:$0xff]
    %v346 = vld [vmem:[#allocation7 + $0x98] sm:$0xff]
    %v347 = vld [vmem:[#allocation7 + $0xa0] sm:$0xff]
    %v348 = vld [vmem:[#allocation7 + $0xa8] sm:$0xff]
    %v349 = vld [vmem:[#allocation7 + $0xb0] sm:$0xff]
    %v350 = vld [vmem:[#allocation7 + $0xb8] sm:$0xff]
    %v351 = vld [vmem:[#allocation7 + $0xc0] sm:$0xff]
    %v352 = vld [vmem:[#allocation7 + $0xc8] sm:$0xff]
    %v353 = vld [vmem:[#allocation7 + $0xd0] sm:$0xff]
    %v354 = vld [vmem:[#allocation7 + $0xd8] sm:$0xff]
    %v355 = vld [vmem:[#allocation7 + $0xe0] sm:$0xff]
    %v356 = vld [vmem:[#allocation7 + $0xe8] sm:$0xff]
    %v357 = vld [vmem:[#allocation7 + $0xf0] sm:$0xff]
    %v358 = vld [vmem:[#allocation7 + $0xf8] sm:$0xff]
    %v359 = vld [vmem:[#allocation7 + $0x100] sm:$0xff]
    %v360 = vld [vmem:[#allocation7 + $0x108] sm:$0xff]
    %v361 = vld [vmem:[#allocation7 + $0x110] sm:$0xff]
    %v362 = vld [vmem:[#allocation7 + $0x118] sm:$0xff]
    %v363 = vld [vmem:[#allocation7 + $0x120] sm:$0xff]
    %v364 = vld [vmem:[#allocation7 + $0x128] sm:$0xff]
    %v365 = vld [vmem:[#allocation7 + $0x130] sm:$0xff]
    %v366 = vld [vmem:[#allocation7 + $0x138] sm:$0xff]
    %v367 = vld [vmem:[#allocation7 + $0x140] sm:$0xff]
    %v368 = vld [vmem:[#allocation7 + $0x148] sm:$0xff]
    %v369 = vld [vmem:[#allocation7 + $0x150] sm:$0xff]
    %v370 = vld [vmem:[#allocation7 + $0x158] sm:$0xff]
    %v371 = vld [vmem:[#allocation7 + $0x160] sm:$0xff]
    %v372 = vld [vmem:[#allocation7 + $0x168] sm:$0xff]
    %v373 = vld [vmem:[#allocation7 + $0x170] sm:$0xff]
    %v374 = vld [vmem:[#allocation7 + $0x178] sm:$0xff]
    %v375 = vld [vmem:[#allocation7 + $0x180] sm:$0xff]
    %v376 = vld [vmem:[#allocation7 + $0x188] sm:$0xff]
    %v377 = vld [vmem:[#allocation7 + $0x190] sm:$0xff]
    %v378 = vld [vmem:[#allocation7 + $0x198] sm:$0xff]
    %v379 = vld [vmem:[#allocation7 + $0x1a0] sm:$0xff]
    %v380 = vld [vmem:[#allocation7 + $0x1a8] sm:$0xff]
    %v381 = vld [vmem:[#allocation7 + $0x1b0] sm:$0xff]
    %v382 = vld [vmem:[#allocation7 + $0x1b8] sm:$0xff]
    %v383 = vld [vmem:[#allocation7 + $0x1c0] sm:$0xff]
    %v384 = vld [vmem:[#allocation7 + $0x1c8] sm:$0xff]
    %v385 = vld [vmem:[#allocation7 + $0x1d0] sm:$0xff]
    %v386 = vld [vmem:[#allocation7 + $0x1d8] sm:$0xff]
    %v387 = vld [vmem:[#allocation7 + $0x1e0] sm:$0xff]
    %v388 = vld [vmem:[#allocation7 + $0x1e8] sm:$0xff]
    %v389 = vld [vmem:[#allocation7 + $0x1f0] sm:$0xff]
    %v390 = vld [vmem:[#allocation7 + $0x1f8] sm:$0xff]
    %v391 = vld [vmem:[#allocation7 + $0x200] sm:$0xff]
    %v392 = vld [vmem:[#allocation7 + $0x208] sm:$0xff]
    %v393 = vld [vmem:[#allocation7 + $0x210] sm:$0xff]
    %v394 = vld [vmem:[#allocation7 + $0x218] sm:$0xff]
    %v395 = vld [vmem:[#allocation7 + $0x220] sm:$0xff]
    %v396 = vld [vmem:[#allocation7 + $0x228] sm:$0xff]
    %v397 = vld [vmem:[#allocation7 + $0x230] sm:$0xff]
    %v398 = vld [vmem:[#allocation7 + $0x238] sm:$0xff]
    %v399 = vld [vmem:[#allocation7 + $0x240] sm:$0xff]
    %v400 = vld [vmem:[#allocation7 + $0x248] sm:$0xff]
    %v401 = vld [vmem:[#allocation7 + $0x250] sm:$0xff]
    %v402 = vld [vmem:[#allocation7 + $0x258] sm:$0xff]
    %v403 = vld [vmem:[#allocation7 + $0x260] sm:$0xff]
    %v404 = vld [vmem:[#allocation7 + $0x268] sm:$0xff]
    %v405 = vld [vmem:[#allocation7 + $0x270] sm:$0xff]
    %v406 = vld [vmem:[#allocation7 + $0x278] sm:$0xff]
    %v407 = vld [vmem:[#allocation7 + $0x280] sm:$0xff]
    %v408 = vld [vmem:[#allocation7 + $0x288] sm:$0xff]
    %v409 = vld [vmem:[#allocation7 + $0x290] sm:$0xff]
    %v410 = vld [vmem:[#allocation7 + $0x298] sm:$0xff]
    %v411 = vld [vmem:[#allocation7 + $0x2a0] sm:$0xff]
    %v412 = vld [vmem:[#allocation7 + $0x2a8] sm:$0xff]
    %v413 = vld [vmem:[#allocation7 + $0x2b0] sm:$0xff]
    %v414 = vld [vmem:[#allocation7 + $0x2b8] sm:$0xff]
    %v415 = vld [vmem:[#allocation7 + $0x2c0] sm:$0xff]
    %v416 = vld [vmem:[#allocation7 + $0x2c8] sm:$0xff]
    %v417 = vld [vmem:[#allocation7 + $0x2d0] sm:$0xff]
    %v418 = vld [vmem:[#allocation7 + $0x2d8] sm:$0xff]
    %v419 = vld [vmem:[#allocation7 + $0x2e0] sm:$0xff]
    %v420 = vld [vmem:[#allocation7 + $0x2e8] sm:$0xff]
    %v421 = vld [vmem:[#allocation7 + $0x2f0] sm:$0xff]
    %v422 = vld [vmem:[#allocation7 + $0x2f8] sm:$0xff]
    %v423 = vld [vmem:[#allocation7 + $0x300] sm:$0xff]
    %v424 = vld [vmem:[#allocation7 + $0x308] sm:$0xff]
    %v425 = vld [vmem:[#allocation7 + $0x310] sm:$0xff]
    %v426 = vld [vmem:[#allocation7 + $0x318] sm:$0xff]
    %v427 = vld [vmem:[#allocation7 + $0x320] sm:$0xff]
    %v428 = vld [vmem:[#allocation7 + $0x328] sm:$0xff]
    %v429 = vld [vmem:[#allocation7 + $0x330] sm:$0xff]
    %v430 = vld [vmem:[#allocation7 + $0x338] sm:$0xff]
    %v431 = vld [vmem:[#allocation7 + $0x340] sm:$0xff]
    %v432 = vld [vmem:[#allocation7 + $0x348] sm:$0xff]
    %v433 = vld [vmem:[#allocation7 + $0x350] sm:$0xff]
    %v434 = vld [vmem:[#allocation7 + $0x358] sm:$0xff]
    %v435 = vld [vmem:[#allocation7 + $0x360] sm:$0xff]
    %v436 = vld [vmem:[#allocation7 + $0x368] sm:$0xff]
    %v437 = vld [vmem:[#allocation7 + $0x370] sm:$0xff]
    %v438 = vld [vmem:[#allocation7 + $0x378] sm:$0xff]
    %v439 = vld [vmem:[#allocation7 + $0x380] sm:$0xff]
    %v440 = vld [vmem:[#allocation7 + $0x388] sm:$0xff]
    %v441 = vld [vmem:[#allocation7 + $0x390] sm:$0xff]
    %v442 = vld [vmem:[#allocation7 + $0x398] sm:$0xff]
    %v443 = vld [vmem:[#allocation7 + $0x3a0] sm:$0xff]
    %v444 = vld [vmem:[#allocation7 + $0x3a8] sm:$0xff]
    %v445 = vld [vmem:[#allocation7 + $0x3b0] sm:$0xff]
    %v446 = vld [vmem:[#allocation7 + $0x3b8] sm:$0xff]
    %v447 = vld [vmem:[#allocation7 + $0x3c0] sm:$0xff]
    %v448 = vld [vmem:[#allocation7 + $0x3c8] sm:$0xff]
    %v449 = vld [vmem:[#allocation7 + $0x3d0] sm:$0xff]
    %v450 = vld [vmem:[#allocation7 + $0x3d8] sm:$0xff]
    %v451 = vld [vmem:[#allocation7 + $0x3e0] sm:$0xff]
    %v452 = vld [vmem:[#allocation7 + $0x3e8] sm:$0xff]
    %v453 = vld [vmem:[#allocation7 + $0x3f0] sm:$0xff]
    %v454 = vld [vmem:[#allocation7 + $0x3f8] sm:$0xff]
    %v455 = vld [vmem:[#allocation7 + $0x400] sm:$0xff]
    %v456 = vld [vmem:[#allocation7 + $0x408] sm:$0xff]
    %v457 = vld [vmem:[#allocation7 + $0x410] sm:$0xff]
    %v458 = vld [vmem:[#allocation7 + $0x418] sm:$0xff]
    %v459 = vld [vmem:[#allocation7 + $0x420] sm:$0xff]
    %v460 = vld [vmem:[#allocation7 + $0x428] sm:$0xff]
    %v461 = vld [vmem:[#allocation7 + $0x430] sm:$0xff]
    %v462 = vld [vmem:[#allocation7 + $0x438] sm:$0xff]
    %v463 = vld [vmem:[#allocation7 + $0x440] sm:$0xff]
    %v464 = vld [vmem:[#allocation7 + $0x448] sm:$0xff]
    %v465 = vld [vmem:[#allocation7 + $0x450] sm:$0xff]
    %v466 = vld [vmem:[#allocation7 + $0x458] sm:$0xff]
    %v467 = vld [vmem:[#allocation7 + $0x460] sm:$0xff]
    %v468 = vld [vmem:[#allocation7 + $0x468] sm:$0xff]
    %v469 = vld [vmem:[#allocation7 + $0x470] sm:$0xff]
    %v470 = vld [vmem:[#allocation7 + $0x478] sm:$0xff]
    %v471 = vld [vmem:[#allocation7 + $0x480] sm:$0xff]
    %v472 = vld [vmem:[#allocation7 + $0x488] sm:$0xff]
    %v473 = vld [vmem:[#allocation7 + $0x490] sm:$0xff]
    %v474 = vld [vmem:[#allocation7 + $0x498] sm:$0xff]
    %v475 = vld [vmem:[#allocation7 + $0x4a0] sm:$0xff]
    %v476 = vld [vmem:[#allocation7 + $0x4a8] sm:$0xff]
    %v477 = vld [vmem:[#allocation7 + $0x4b0] sm:$0xff]
    %v478 = vld [vmem:[#allocation7 + $0x4b8] sm:$0xff]
    %v479 = vld [vmem:[#allocation7 + $0x4c0] sm:$0xff]
    %v480 = vld [vmem:[#allocation7 + $0x4c8] sm:$0xff]
    %v481 = vld [vmem:[#allocation7 + $0x4d0] sm:$0xff]
    %v482 = vld [vmem:[#allocation7 + $0x4d8] sm:$0xff]
    %v483 = vld [vmem:[#allocation7 + $0x4e0] sm:$0xff]
    %v484 = vld [vmem:[#allocation7 + $0x4e8] sm:$0xff]
    %v485 = vld [vmem:[#allocation7 + $0x4f0] sm:$0xff]
    %v486 = vld [vmem:[#allocation7 + $0x4f8] sm:$0xff]
    %v487 = vld [vmem:[%s4] sm:$0xf]
    %v489 = vlaneseq
    %v490 = vshrl.u32 %v489, 7
    %v491 = vsub.s32 0, %v490
    %v492 = vrot.slane %v487, %v491
    %v493 = vlaneseq
    %v494 = vshrl.u32 %v493, 7
    %v495 = vsub.s32 1, %v494
    %v496 = vrot.slane %v487, %v495
    %v497 = vlaneseq
    %v498 = vshrl.u32 %v497, 7
    %v499 = vsub.s32 2, %v498
    %v500 = vrot.slane %v487, %v499
    %v501 = vlaneseq
    %v502 = vshrl.u32 %v501, 7
    %v503 = vsub.s32 3, %v502
    %v504 = vrot.slane %v487, %v503
    %v669 = vunpack.c.l.b16 %v327
    %v670 = vunpack.c.h.b16 %v327
    %v671 = vunpack.c.l.b16 %v328
    %v672 = vunpack.c.h.b16 %v328
    %v673 = vunpack.c.l.b16 %v329
    %v674 = vunpack.c.h.b16 %v329
    %v675 = vunpack.c.l.b16 %v330
    %v676 = vunpack.c.h.b16 %v330
    %v677 = vunpack.c.l.b16 %v331
    %v678 = vunpack.c.h.b16 %v331
    %v679 = vunpack.c.l.b16 %v332
    %v680 = vunpack.c.h.b16 %v332
    %v681 = vunpack.c.l.b16 %v333
    %v682 = vunpack.c.h.b16 %v333
    %v683 = vunpack.c.l.b16 %v334
    %v684 = vunpack.c.h.b16 %v334
    %v685 = vunpack.c.l.b16 %v335
    %v686 = vunpack.c.h.b16 %v335
    %v687 = vunpack.c.l.b16 %v336
    %v688 = vunpack.c.h.b16 %v336
    %v689 = vunpack.c.l.b16 %v337
    %v690 = vunpack.c.h.b16 %v337
    %v691 = vunpack.c.l.b16 %v338
    %v692 = vunpack.c.h.b16 %v338
    %v693 = vunpack.c.l.b16 %v339
    %v694 = vunpack.c.h.b16 %v339
    %v695 = vunpack.c.l.b16 %v340
    %v696 = vunpack.c.h.b16 %v340
    %v697 = vunpack.c.l.b16 %v341
    %v698 = vunpack.c.h.b16 %v341
    %v699 = vunpack.c.l.b16 %v342
    %v700 = vunpack.c.h.b16 %v342
    %v701 = vunpack.c.l.b16 %v343
    %v702 = vunpack.c.h.b16 %v343
    %v703 = vunpack.c.l.b16 %v344
    %v704 = vunpack.c.h.b16 %v344
    %v705 = vunpack.c.l.b16 %v345
    %v706 = vunpack.c.h.b16 %v345
    %v707 = vunpack.c.l.b16 %v346
    %v708 = vunpack.c.h.b16 %v346
    %v709 = vunpack.c.l.b16 %v347
    %v710 = vunpack.c.h.b16 %v347
    %v711 = vunpack.c.l.b16 %v348
    %v712 = vunpack.c.h.b16 %v348
    %v713 = vunpack.c.l.b16 %v349
    %v714 = vunpack.c.h.b16 %v349
    %v715 = vunpack.c.l.b16 %v350
    %v716 = vunpack.c.h.b16 %v350
    %v717 = vunpack.c.l.b16 %v351
    %v718 = vunpack.c.h.b16 %v351
    %v719 = vunpack.c.l.b16 %v352
    %v720 = vunpack.c.h.b16 %v352
    %v721 = vunpack.c.l.b16 %v353
    %v722 = vunpack.c.h.b16 %v353
    %v723 = vunpack.c.l.b16 %v354
    %v724 = vunpack.c.h.b16 %v354
    %v725 = vunpack.c.l.b16 %v355
    %v726 = vunpack.c.h.b16 %v355
    %v727 = vunpack.c.l.b16 %v356
    %v728 = vunpack.c.h.b16 %v356
    %v729 = vunpack.c.l.b16 %v357
    %v730 = vunpack.c.h.b16 %v357
    %v731 = vunpack.c.l.b16 %v358
    %v732 = vunpack.c.h.b16 %v358
    %v733 = vunpack.c.l.b16 %v359
    %v734 = vunpack.c.h.b16 %v359
    %v735 = vunpack.c.l.b16 %v360
    %v736 = vunpack.c.h.b16 %v360
    %v737 = vunpack.c.l.b16 %v361
    %v738 = vunpack.c.h.b16 %v361
    %v739 = vunpack.c.l.b16 %v362
    %v740 = vunpack.c.h.b16 %v362
    %v741 = vunpack.c.l.b16 %v363
    %v742 = vunpack.c.h.b16 %v363
    %v743 = vunpack.c.l.b16 %v364
    %v744 = vunpack.c.h.b16 %v364
    %v745 = vunpack.c.l.b16 %v365
    %v746 = vunpack.c.h.b16 %v365
    %v747 = vunpack.c.l.b16 %v366
    %v748 = vunpack.c.h.b16 %v366
    %v749 = vunpack.c.l.b16 %v367
    %v750 = vunpack.c.h.b16 %v367
    %v751 = vunpack.c.l.b16 %v368
    %v752 = vunpack.c.h.b16 %v368
    %v753 = vunpack.c.l.b16 %v369
    %v754 = vunpack.c.h.b16 %v369
    %v755 = vunpack.c.l.b16 %v370
    %v756 = vunpack.c.h.b16 %v370
    %v757 = vunpack.c.l.b16 %v371
    %v758 = vunpack.c.h.b16 %v371
    %v759 = vunpack.c.l.b16 %v372
    %v760 = vunpack.c.h.b16 %v372
    %v761 = vunpack.c.l.b16 %v373
    %v762 = vunpack.c.h.b16 %v373
    %v763 = vunpack.c.l.b16 %v374
    %v764 = vunpack.c.h.b16 %v374
    %v765 = vunpack.c.l.b16 %v375
    %v766 = vunpack.c.h.b16 %v375
    %v767 = vunpack.c.l.b16 %v376
    %v768 = vunpack.c.h.b16 %v376
    %v769 = vunpack.c.l.b16 %v377
    %v770 = vunpack.c.h.b16 %v377
    %v771 = vunpack.c.l.b16 %v378
    %v772 = vunpack.c.h.b16 %v378
    %v773 = vunpack.c.l.b16 %v379
    %v774 = vunpack.c.h.b16 %v379
    %v775 = vunpack.c.l.b16 %v380
    %v776 = vunpack.c.h.b16 %v380
    %v777 = vunpack.c.l.b16 %v381
    %v778 = vunpack.c.h.b16 %v381
    %v779 = vunpack.c.l.b16 %v382
    %v780 = vunpack.c.h.b16 %v382
    %v781 = vunpack.c.l.b16 %v383
    %v782 = vunpack.c.h.b16 %v383
    %v783 = vunpack.c.l.b16 %v384
    %v784 = vunpack.c.h.b16 %v384
    %v785 = vunpack.c.l.b16 %v385
    %v786 = vunpack.c.h.b16 %v385
    %v787 = vunpack.c.l.b16 %v386
    %v788 = vunpack.c.h.b16 %v386
    %v789 = vunpack.c.l.b16 %v387
    %v790 = vunpack.c.h.b16 %v387
    %v791 = vunpack.c.l.b16 %v388
    %v792 = vunpack.c.h.b16 %v388
    %v793 = vunpack.c.l.b16 %v389
    %v794 = vunpack.c.h.b16 %v389
    %v795 = vunpack.c.l.b16 %v390
    %v796 = vunpack.c.h.b16 %v390
    %v797 = vunpack.c.l.b16 %v391
    %v798 = vunpack.c.h.b16 %v391
    %v799 = vunpack.c.l.b16 %v392
    %v800 = vunpack.c.h.b16 %v392
    %v801 = vunpack.c.l.b16 %v393
    %v802 = vunpack.c.h.b16 %v393
    %v803 = vunpack.c.l.b16 %v394
    %v804 = vunpack.c.h.b16 %v394
    %v805 = vunpack.c.l.b16 %v395
    %v806 = vunpack.c.h.b16 %v395
    %v807 = vunpack.c.l.b16 %v396
    %v808 = vunpack.c.h.b16 %v396
    %v809 = vunpack.c.l.b16 %v397
    %v810 = vunpack.c.h.b16 %v397
    %v811 = vunpack.c.l.b16 %v398
    %v812 = vunpack.c.h.b16 %v398
    %v813 = vunpack.c.l.b16 %v399
    %v814 = vunpack.c.h.b16 %v399
    %v815 = vunpack.c.l.b16 %v400
    %v816 = vunpack.c.h.b16 %v400
    %v817 = vunpack.c.l.b16 %v401
    %v818 = vunpack.c.h.b16 %v401
    %v819 = vunpack.c.l.b16 %v402
    %v820 = vunpack.c.h.b16 %v402
    %v821 = vunpack.c.l.b16 %v403
    %v822 = vunpack.c.h.b16 %v403
    %v823 = vunpack.c.l.b16 %v404
    %v824 = vunpack.c.h.b16 %v404
    %v825 = vunpack.c.l.b16 %v405
    %v826 = vunpack.c.h.b16 %v405
    %v827 = vunpack.c.l.b16 %v406
    %v828 = vunpack.c.h.b16 %v406
    %v829 = vunpack.c.l.b16 %v407
    %v830 = vunpack.c.h.b16 %v407
    %v831 = vunpack.c.l.b16 %v408
    %v832 = vunpack.c.h.b16 %v408
    %v833 = vunpack.c.l.b16 %v409
    %v834 = vunpack.c.h.b16 %v409
    %v835 = vunpack.c.l.b16 %v410
    %v836 = vunpack.c.h.b16 %v410
    %v837 = vunpack.c.l.b16 %v411
    %v838 = vunpack.c.h.b16 %v411
    %v839 = vunpack.c.l.b16 %v412
    %v840 = vunpack.c.h.b16 %v412
    %v841 = vunpack.c.l.b16 %v413
    %v842 = vunpack.c.h.b16 %v413
    %v843 = vunpack.c.l.b16 %v414
    %v844 = vunpack.c.h.b16 %v414
    %v845 = vunpack.c.l.b16 %v415
    %v846 = vunpack.c.h.b16 %v415
    %v847 = vunpack.c.l.b16 %v416
    %v848 = vunpack.c.h.b16 %v416
    %v849 = vunpack.c.l.b16 %v417
    %v850 = vunpack.c.h.b16 %v417
    %v851 = vunpack.c.l.b16 %v418
    %v852 = vunpack.c.h.b16 %v418
    %v853 = vunpack.c.l.b16 %v419
    %v854 = vunpack.c.h.b16 %v419
    %v855 = vunpack.c.l.b16 %v420
    %v856 = vunpack.c.h.b16 %v420
    %v857 = vunpack.c.l.b16 %v421
    %v858 = vunpack.c.h.b16 %v421
    %v859 = vunpack.c.l.b16 %v422
    %v860 = vunpack.c.h.b16 %v422
    %v861 = vunpack.c.l.b16 %v423
    %v862 = vunpack.c.h.b16 %v423
    %v863 = vunpack.c.l.b16 %v424
    %v864 = vunpack.c.h.b16 %v424
    %v865 = vunpack.c.l.b16 %v425
    %v866 = vunpack.c.h.b16 %v425
    %v867 = vunpack.c.l.b16 %v426
    %v868 = vunpack.c.h.b16 %v426
    %v869 = vunpack.c.l.b16 %v427
    %v870 = vunpack.c.h.b16 %v427
    %v871 = vunpack.c.l.b16 %v428
    %v872 = vunpack.c.h.b16 %v428
    %v873 = vunpack.c.l.b16 %v429
    %v874 = vunpack.c.h.b16 %v429
    %v875 = vunpack.c.l.b16 %v430
    %v876 = vunpack.c.h.b16 %v430
    %v877 = vunpack.c.l.b16 %v431
    %v878 = vunpack.c.h.b16 %v431
    %v879 = vunpack.c.l.b16 %v432
    %v880 = vunpack.c.h.b16 %v432
    %v881 = vunpack.c.l.b16 %v433
    %v882 = vunpack.c.h.b16 %v433
    %v883 = vunpack.c.l.b16 %v434
    %v884 = vunpack.c.h.b16 %v434
    %v885 = vunpack.c.l.b16 %v435
    %v886 = vunpack.c.h.b16 %v435
    %v887 = vunpack.c.l.b16 %v436
    %v888 = vunpack.c.h.b16 %v436
    %v889 = vunpack.c.l.b16 %v437
    %v890 = vunpack.c.h.b16 %v437
    %v891 = vunpack.c.l.b16 %v438
    %v892 = vunpack.c.h.b16 %v438
    %v893 = vunpack.c.l.b16 %v439
    %v894 = vunpack.c.h.b16 %v439
    %v895 = vunpack.c.l.b16 %v440
    %v896 = vunpack.c.h.b16 %v440
    %v897 = vunpack.c.l.b16 %v441
    %v898 = vunpack.c.h.b16 %v441
    %v899 = vunpack.c.l.b16 %v442
    %v900 = vunpack.c.h.b16 %v442
    %v901 = vunpack.c.l.b16 %v443
    %v902 = vunpack.c.h.b16 %v443
    %v903 = vunpack.c.l.b16 %v444
    %v904 = vunpack.c.h.b16 %v444
    %v905 = vunpack.c.l.b16 %v445
    %v906 = vunpack.c.h.b16 %v445
    %v907 = vunpack.c.l.b16 %v446
    %v908 = vunpack.c.h.b16 %v446
    %v909 = vunpack.c.l.b16 %v447
    %v910 = vunpack.c.h.b16 %v447
    %v911 = vunpack.c.l.b16 %v448
    %v912 = vunpack.c.h.b16 %v448
    %v913 = vunpack.c.l.b16 %v449
    %v914 = vunpack.c.h.b16 %v449
    %v915 = vunpack.c.l.b16 %v450
    %v916 = vunpack.c.h.b16 %v450
    %v917 = vunpack.c.l.b16 %v451
    %v918 = vunpack.c.h.b16 %v451
    %v919 = vunpack.c.l.b16 %v452
    %v920 = vunpack.c.h.b16 %v452
    %v921 = vunpack.c.l.b16 %v453
    %v922 = vunpack.c.h.b16 %v453
    %v923 = vunpack.c.l.b16 %v454
    %v924 = vunpack.c.h.b16 %v454
    %v925 = vunpack.c.l.b16 %v455
    %v926 = vunpack.c.h.b16 %v455
    %v927 = vunpack.c.l.b16 %v456
    %v928 = vunpack.c.h.b16 %v456
    %v929 = vunpack.c.l.b16 %v457
    %v930 = vunpack.c.h.b16 %v457
    %v931 = vunpack.c.l.b16 %v458
    %v932 = vunpack.c.h.b16 %v458
    %v933 = vunpack.c.l.b16 %v459
    %v934 = vunpack.c.h.b16 %v459
    %v935 = vunpack.c.l.b16 %v460
    %v936 = vunpack.c.h.b16 %v460
    %v937 = vunpack.c.l.b16 %v461
    %v938 = vunpack.c.h.b16 %v461
    %v939 = vunpack.c.l.b16 %v462
    %v940 = vunpack.c.h.b16 %v462
    %v941 = vunpack.c.l.b16 %v463
    %v942 = vunpack.c.h.b16 %v463
    %v943 = vunpack.c.l.b16 %v464
    %v944 = vunpack.c.h.b16 %v464
    %v945 = vunpack.c.l.b16 %v465
    %v946 = vunpack.c.h.b16 %v465
    %v947 = vunpack.c.l.b16 %v466
    %v948 = vunpack.c.h.b16 %v466
    %v949 = vunpack.c.l.b16 %v467
    %v950 = vunpack.c.h.b16 %v467
    %v951 = vunpack.c.l.b16 %v468
    %v952 = vunpack.c.h.b16 %v468
    %v953 = vunpack.c.l.b16 %v469
    %v954 = vunpack.c.h.b16 %v469
    %v955 = vunpack.c.l.b16 %v470
    %v956 = vunpack.c.h.b16 %v470
    %v957 = vunpack.c.l.b16 %v471
    %v958 = vunpack.c.h.b16 %v471
    %v959 = vunpack.c.l.b16 %v472
    %v960 = vunpack.c.h.b16 %v472
    %v961 = vunpack.c.l.b16 %v473
    %v962 = vunpack.c.h.b16 %v473
    %v963 = vunpack.c.l.b16 %v474
    %v964 = vunpack.c.h.b16 %v474
    %v965 = vunpack.c.l.b16 %v475
    %v966 = vunpack.c.h.b16 %v475
    %v967 = vunpack.c.l.b16 %v476
    %v968 = vunpack.c.h.b16 %v476
    %v969 = vunpack.c.l.b16 %v477
    %v970 = vunpack.c.h.b16 %v477
    %v971 = vunpack.c.l.b16 %v478
    %v972 = vunpack.c.h.b16 %v478
    %v973 = vunpack.c.l.b16 %v479
    %v974 = vunpack.c.h.b16 %v479
    %v975 = vunpack.c.l.b16 %v480
    %v976 = vunpack.c.h.b16 %v480
    %v977 = vunpack.c.l.b16 %v481
    %v978 = vunpack.c.h.b16 %v481
    %v979 = vunpack.c.l.b16 %v482
    %v980 = vunpack.c.h.b16 %v482
    %v981 = vunpack.c.l.b16 %v483
    %v982 = vunpack.c.h.b16 %v483
    %v983 = vunpack.c.l.b16 %v484
    %v984 = vunpack.c.h.b16 %v484
    %v985 = vunpack.c.l.b16 %v485
    %v986 = vunpack.c.h.b16 %v485
    %v987 = vunpack.c.l.b16 %v486
    %v988 = vunpack.c.h.b16 %v486
    %v989 = vpack.c.b16 %v673, %v669
    %v990 = vpack.c.b16 %v674, %v670
    %v991 = vpack.c.b16 %v675, %v671
    %v992 = vpack.c.b16 %v676, %v672
    %v993 = vpack.c.b16 %v681, %v677
    %v994 = vpack.c.b16 %v682, %v678
    %v995 = vpack.c.b16 %v683, %v679
    %v996 = vpack.c.b16 %v684, %v680
    %v997 = vpack.c.b16 %v689, %v685
    %v998 = vpack.c.b16 %v690, %v686
    %v999 = vpack.c.b16 %v691, %v687
    %v1000 = vpack.c.b16 %v692, %v688
    %v1001 = vpack.c.b16 %v697, %v693
    %v1002 = vpack.c.b16 %v698, %v694
    %v1003 = vpack.c.b16 %v699, %v695
    %v1004 = vpack.c.b16 %v700, %v696
    %v1005 = vpack.c.b16 %v705, %v701
    %v1006 = vpack.c.b16 %v706, %v702
    %v1007 = vpack.c.b16 %v707, %v703
    %v1008 = vpack.c.b16 %v708, %v704
    %v1009 = vpack.c.b16 %v713, %v709
    %v1010 = vpack.c.b16 %v714, %v710
    %v1011 = vpack.c.b16 %v715, %v711
    %v1012 = vpack.c.b16 %v716, %v712
    %v1013 = vpack.c.b16 %v721, %v717
    %v1014 = vpack.c.b16 %v722, %v718
    %v1015 = vpack.c.b16 %v723, %v719
    %v1016 = vpack.c.b16 %v724, %v720
    %v1017 = vpack.c.b16 %v729, %v725
    %v1018 = vpack.c.b16 %v730, %v726
    %v1019 = vpack.c.b16 %v731, %v727
    %v1020 = vpack.c.b16 %v732, %v728
    %v1021 = vpack.c.b16 %v737, %v733
    %v1022 = vpack.c.b16 %v738, %v734
    %v1023 = vpack.c.b16 %v739, %v735
    %v1024 = vpack.c.b16 %v740, %v736
    %v1025 = vpack.c.b16 %v745, %v741
    %v1026 = vpack.c.b16 %v746, %v742
    %v1027 = vpack.c.b16 %v747, %v743
    %v1028 = vpack.c.b16 %v748, %v744
    %v1029 = vpack.c.b16 %v753, %v749
    %v1030 = vpack.c.b16 %v754, %v750
    %v1031 = vpack.c.b16 %v755, %v751
    %v1032 = vpack.c.b16 %v756, %v752
    %v1033 = vpack.c.b16 %v761, %v757
    %v1034 = vpack.c.b16 %v762, %v758
    %v1035 = vpack.c.b16 %v763, %v759
    %v1036 = vpack.c.b16 %v764, %v760
    %v1037 = vpack.c.b16 %v769, %v765
    %v1038 = vpack.c.b16 %v770, %v766
    %v1039 = vpack.c.b16 %v771, %v767
    %v1040 = vpack.c.b16 %v772, %v768
    %v1041 = vpack.c.b16 %v777, %v773
    %v1042 = vpack.c.b16 %v778, %v774
    %v1043 = vpack.c.b16 %v779, %v775
    %v1044 = vpack.c.b16 %v780, %v776
    %v1045 = vpack.c.b16 %v785, %v781
    %v1046 = vpack.c.b16 %v786, %v782
    %v1047 = vpack.c.b16 %v787, %v783
    %v1048 = vpack.c.b16 %v788, %v784
    %v1049 = vpack.c.b16 %v793, %v789
    %v1050 = vpack.c.b16 %v794, %v790
    %v1051 = vpack.c.b16 %v795, %v791
    %v1052 = vpack.c.b16 %v796, %v792
    %v1053 = vpack.c.b16 %v801, %v797
    %v1054 = vpack.c.b16 %v802, %v798
    %v1055 = vpack.c.b16 %v803, %v799
    %v1056 = vpack.c.b16 %v804, %v800
    %v1057 = vpack.c.b16 %v809, %v805
    %v1058 = vpack.c.b16 %v810, %v806
    %v1059 = vpack.c.b16 %v811, %v807
    %v1060 = vpack.c.b16 %v812, %v808
    %v1061 = vpack.c.b16 %v817, %v813
    %v1062 = vpack.c.b16 %v818, %v814
    %v1063 = vpack.c.b16 %v819, %v815
    %v1064 = vpack.c.b16 %v820, %v816
    %v1065 = vpack.c.b16 %v825, %v821
    %v1066 = vpack.c.b16 %v826, %v822
    %v1067 = vpack.c.b16 %v827, %v823
    %v1068 = vpack.c.b16 %v828, %v824
    %v1069 = vpack.c.b16 %v833, %v829
    %v1070 = vpack.c.b16 %v834, %v830
    %v1071 = vpack.c.b16 %v835, %v831
    %v1072 = vpack.c.b16 %v836, %v832
    %v1073 = vpack.c.b16 %v841, %v837
    %v1074 = vpack.c.b16 %v842, %v838
    %v1075 = vpack.c.b16 %v843, %v839
    %v1076 = vpack.c.b16 %v844, %v840
    %v1077 = vpack.c.b16 %v849, %v845
    %v1078 = vpack.c.b16 %v850, %v846
    %v1079 = vpack.c.b16 %v851, %v847
    %v1080 = vpack.c.b16 %v852, %v848
    %v1081 = vpack.c.b16 %v857, %v853
    %v1082 = vpack.c.b16 %v858, %v854
    %v1083 = vpack.c.b16 %v859, %v855
    %v1084 = vpack.c.b16 %v860, %v856
    %v1085 = vpack.c.b16 %v865, %v861
    %v1086 = vpack.c.b16 %v866, %v862
    %v1087 = vpack.c.b16 %v867, %v863
    %v1088 = vpack.c.b16 %v868, %v864
    %v1089 = vpack.c.b16 %v873, %v869
    %v1090 = vpack.c.b16 %v874, %v870
    %v1091 = vpack.c.b16 %v875, %v871
    %v1092 = vpack.c.b16 %v876, %v872
    %v1093 = vpack.c.b16 %v881, %v877
    %v1094 = vpack.c.b16 %v882, %v878
    %v1095 = vpack.c.b16 %v883, %v879
    %v1096 = vpack.c.b16 %v884, %v880
    %v1097 = vpack.c.b16 %v889, %v885
    %v1098 = vpack.c.b16 %v890, %v886
    %v1099 = vpack.c.b16 %v891, %v887
    %v1100 = vpack.c.b16 %v892, %v888
    %v1101 = vpack.c.b16 %v897, %v893
    %v1102 = vpack.c.b16 %v898, %v894
    %v1103 = vpack.c.b16 %v899, %v895
    %v1104 = vpack.c.b16 %v900, %v896
    %v1105 = vpack.c.b16 %v905, %v901
    %v1106 = vpack.c.b16 %v906, %v902
    %v1107 = vpack.c.b16 %v907, %v903
    %v1108 = vpack.c.b16 %v908, %v904
    %v1109 = vpack.c.b16 %v913, %v909
    %v1110 = vpack.c.b16 %v914, %v910
    %v1111 = vpack.c.b16 %v915, %v911
    %v1112 = vpack.c.b16 %v916, %v912
    %v1113 = vpack.c.b16 %v921, %v917
    %v1114 = vpack.c.b16 %v922, %v918
    %v1115 = vpack.c.b16 %v923, %v919
    %v1116 = vpack.c.b16 %v924, %v920
    %v1117 = vpack.c.b16 %v929, %v925
    %v1118 = vpack.c.b16 %v930, %v926
    %v1119 = vpack.c.b16 %v931, %v927
    %v1120 = vpack.c.b16 %v932, %v928
    %v1121 = vpack.c.b16 %v937, %v933
    %v1122 = vpack.c.b16 %v938, %v934
    %v1123 = vpack.c.b16 %v939, %v935
    %v1124 = vpack.c.b16 %v940, %v936
    %v1125 = vpack.c.b16 %v945, %v941
    %v1126 = vpack.c.b16 %v946, %v942
    %v1127 = vpack.c.b16 %v947, %v943
    %v1128 = vpack.c.b16 %v948, %v944
    %v1129 = vpack.c.b16 %v953, %v949
    %v1130 = vpack.c.b16 %v954, %v950
    %v1131 = vpack.c.b16 %v955, %v951
    %v1132 = vpack.c.b16 %v956, %v952
    %v1133 = vpack.c.b16 %v961, %v957
    %v1134 = vpack.c.b16 %v962, %v958
    %v1135 = vpack.c.b16 %v963, %v959
    %v1136 = vpack.c.b16 %v964, %v960
    %v1137 = vpack.c.b16 %v969, %v965
    %v1138 = vpack.c.b16 %v970, %v966
    %v1139 = vpack.c.b16 %v971, %v967
    %v1140 = vpack.c.b16 %v972, %v968
    %v1141 = vpack.c.b16 %v977, %v973
    %v1142 = vpack.c.b16 %v978, %v974
    %v1143 = vpack.c.b16 %v979, %v975
    %v1144 = vpack.c.b16 %v980, %v976
    %v1145 = vpack.c.b16 %v985, %v981
    %v1146 = vpack.c.b16 %v986, %v982
    %v1147 = vpack.c.b16 %v987, %v983
    %v1148 = vpack.c.b16 %v988, %v984
    %1309 = vmatprep.subr.bf16.mxu0 %v990
    %1310 = vmatpush1.bf16.msra.mxu0 %v989
    %1311 = vmatprep.subr.bf16.mxu0 %v994
    %1312 = vmatpush1.bf16.msra.mxu0 %v993
    %1313 = vmatprep.subr.bf16.mxu0 %v998
    %1314 = vmatpush1.bf16.msra.mxu0 %v997
    %1315 = vmatprep.subr.bf16.mxu0 %v1002
    %1316 = vmatpush1.bf16.msra.mxu0 %v1001
    %1317 = vmatprep.subr.bf16.mxu0 %v1006
    %1318 = vmatpush1.bf16.msra.mxu0 %v1005
    %1319 = vmatprep.subr.bf16.mxu0 %v1010
    %1320 = vmatpush1.bf16.msra.mxu0 %v1009
    %1321 = vmatprep.subr.bf16.mxu0 %v1014
    %1322 = vmatpush1.bf16.msra.mxu0 %v1013
    %1323 = vmatprep.subr.bf16.mxu0 %v1018
    %1324 = vmatpush1.bf16.msra.mxu0 %v1017
    %1325 = vmatprep.subr.bf16.mxu0 %v1022
    %1326 = vmatpush1.bf16.msra.mxu0 %v1021
    %1327 = vmatprep.subr.bf16.mxu0 %v1026
    %1328 = vmatpush1.bf16.msra.mxu0 %v1025
    %1329 = vmatprep.subr.bf16.mxu0 %v1030
    %1330 = vmatpush1.bf16.msra.mxu0 %v1029
    %1331 = vmatprep.subr.bf16.mxu0 %v1034
    %1332 = vmatpush1.bf16.msra.mxu0 %v1033
    %1333 = vmatprep.subr.bf16.mxu0 %v1038
    %1334 = vmatpush1.bf16.msra.mxu0 %v1037
    %1335 = vmatprep.subr.bf16.mxu0 %v1042
    %1336 = vmatpush1.bf16.msra.mxu0 %v1041
    %1337 = vmatprep.subr.bf16.mxu0 %v1046
    %1338 = vmatpush1.bf16.msra.mxu0 %v1045
    %1339 = vmatprep.subr.bf16.mxu0 %v1050
    %1340 = vmatpush1.bf16.msra.mxu0 %v1049
    %1341 = vmatprep.mubr.bf16.mxu0 %v323
    %1342 = vmatmul.mubr.bf16.gmra.mrb[0].mxu0 %v322
    %v1343 = vpop.f32.mrb[0].mxu0
    %v1344 = vadd.f32 %v492, %v1343
    %v1345 = vpop.f32.mrb[0].mxu0
    %v1346 = vadd.f32 %v496, %v1345
    %v1347 = vpop.f32.mrb[0].mxu0
    %v1348 = vadd.f32 %v492, %v1347
    %v1349 = vpop.f32.mrb[0].mxu0
    %v1350 = vadd.f32 %v496, %v1349
    %1351 = vdwg.mxu0
    %1352 = vmatprep.subr.bf16.mxu0 %v1054
    %1353 = vmatpush1.bf16.msra.mxu0 %v1053
    %1354 = vmatprep.subr.bf16.mxu0 %v1058
    %1355 = vmatpush1.bf16.msra.mxu0 %v1057
    %1356 = vmatprep.subr.bf16.mxu0 %v1062
    %1357 = vmatpush1.bf16.msra.mxu0 %v1061
    %1358 = vmatprep.subr.bf16.mxu0 %v1066
    %1359 = vmatpush1.bf16.msra.mxu0 %v1065
    %1360 = vmatprep.subr.bf16.mxu0 %v1070
    %1361 = vmatpush1.bf16.msra.mxu0 %v1069
    %1362 = vmatprep.subr.bf16.mxu0 %v1074
    %1363 = vmatpush1.bf16.msra.mxu0 %v1073
    %1364 = vmatprep.subr.bf16.mxu0 %v1078
    %1365 = vmatpush1.bf16.msra.mxu0 %v1077
    %1366 = vmatprep.subr.bf16.mxu0 %v1082
    %1367 = vmatpush1.bf16.msra.mxu0 %v1081
    %1368 = vmatprep.subr.bf16.mxu0 %v1086
    %1369 = vmatpush1.bf16.msra.mxu0 %v1085
    %1370 = vmatprep.subr.bf16.mxu0 %v1090
    %1371 = vmatpush1.bf16.msra.mxu0 %v1089
    %1372 = vmatprep.subr.bf16.mxu0 %v1094
    %1373 = vmatpush1.bf16.msra.mxu0 %v1093
    %1374 = vmatprep.subr.bf16.mxu0 %v1098
    %1375 = vmatpush1.bf16.msra.mxu0 %v1097
    %1376 = vmatprep.subr.bf16.mxu0 %v1102
    %1377 = vmatpush1.bf16.msra.mxu0 %v1101
    %1378 = vmatprep.subr.bf16.mxu0 %v1106
    %1379 = vmatpush1.bf16.msra.mxu0 %v1105
    %1380 = vmatprep.subr.bf16.mxu0 %v1110
    %1381 = vmatpush1.bf16.msra.mxu0 %v1109
    %1382 = vmatprep.subr.bf16.mxu0 %v1114
    %1383 = vmatpush1.bf16.msra.mxu0 %v1113
    %1384 = vmatprep.mubr.bf16.mxu0 %v325
    %1385 = vmatmul.mubr.bf16.gmra.mrb[0].mxu0 %v324
    %v1386 = vpop.f32.mrb[0].mxu0
    %v1387 = vadd.f32 %v1344, %v1386
    %v1388 = vpop.f32.mrb[0].mxu0
    %v1389 = vadd.f32 %v1346, %v1388
    %v1390 = vpop.f32.mrb[0].mxu0
    %v1391 = vadd.f32 %v1348, %v1390
    %v1392 = vpop.f32.mrb[0].mxu0
    %v1393 = vadd.f32 %v1350, %v1392
    %1394 = vdwg.mxu0
    %1395 = vmatprep.subr.bf16.mxu0 %v1118
    %1396 = vmatpush1.bf16.msra.mxu0 %v1117
    %1397 = vmatprep.subr.bf16.mxu0 %v1122
    %1398 = vmatpush1.bf16.msra.mxu0 %v1121
    %1399 = vmatprep.subr.bf16.mxu0 %v1126
    %1400 = vmatpush1.bf16.msra.mxu0 %v1125
    %1401 = vmatprep.subr.bf16.mxu0 %v1130
    %1402 = vmatpush1.bf16.msra.mxu0 %v1129
    %1403 = vmatprep.subr.bf16.mxu0 %v1134
    %1404 = vmatpush1.bf16.msra.mxu0 %v1133
    %1405 = vmatprep.subr.bf16.mxu0 %v1138
    %1406 = vmatpush1.bf16.msra.mxu0 %v1137
    %1407 = vmatprep.subr.bf16.mxu0 %v1142
    %1408 = vmatpush1.bf16.msra.mxu0 %v1141
    %1409 = vmatprep.subr.bf16.mxu0 %v1146
    %1410 = vmatpush1.bf16.msra.mxu0 %v1145
    %1411 = vmatprep.subr.bf16.mxu0 0
    %1412 = vmatpush1.bf16.msra.mxu0 0
    %1413 = vmatprep.subr.bf16.mxu0 0
    %1414 = vmatpush1.bf16.msra.mxu0 0
    %1415 = vmatprep.subr.bf16.mxu0 0
    %1416 = vmatpush1.bf16.msra.mxu0 0
    %1417 = vmatprep.subr.bf16.mxu0 0
    %1418 = vmatpush1.bf16.msra.mxu0 0
    %1419 = vmatprep.subr.bf16.mxu0 0
    %1420 = vmatpush1.bf16.msra.mxu0 0
    %1421 = vmatprep.subr.bf16.mxu0 0
    %1422 = vmatpush1.bf16.msra.mxu0 0
    %1423 = vmatprep.subr.bf16.mxu0 0
    %1424 = vmatpush1.bf16.msra.mxu0 0
    %1425 = vmatprep.subr.bf16.mxu0 0
    %1426 = vmatpush1.bf16.msra.mxu0 0
    %1427 = vmatprep.mubr.bf16.mxu0 0
    %1428 = vmatmul.mubr.bf16.gmra.mrb[0].mxu0 %v326
    %v1429 = vpop.f32.mrb[0].mxu0
    %v1430 = vadd.f32 %v1387, %v1429
    %v1431 = vpop.f32.mrb[0].mxu0
    %v1432 = vadd.f32 %v1389, %v1431
    %v1433 = vpop.f32.mrb[0].mxu0
    %v1434 = vadd.f32 %v1391, %v1433
    %v1435 = vpop.f32.mrb[0].mxu0
    %v1436 = vadd.f32 %v1393, %v1435
    %1437 = vdwg.mxu0
    %1438 = vmatprep.subr.bf16.mxu0 %v992
    %1439 = vmatpush1.bf16.msra.mxu0 %v991
    %1440 = vmatprep.subr.bf16.mxu0 %v996
    %1441 = vmatpush1.bf16.msra.mxu0 %v995
    %1442 = vmatprep.subr.bf16.mxu0 %v1000
    %1443 = vmatpush1.bf16.msra.mxu0 %v999
    %1444 = vmatprep.subr.bf16.mxu0 %v1004
    %1445 = vmatpush1.bf16.msra.mxu0 %v1003
    %1446 = vmatprep.subr.bf16.mxu0 %v1008
    %1447 = vmatpush1.bf16.msra.mxu0 %v1007
    %1448 = vmatprep.subr.bf16.mxu0 %v1012
    %1449 = vmatpush1.bf16.msra.mxu0 %v1011
    %1450 = vmatprep.subr.bf16.mxu0 %v1016
    %1451 = vmatpush1.bf16.msra.mxu0 %v1015
    %1452 = vmatprep.subr.bf16.mxu0 %v1020
    %1453 = vmatpush1.bf16.msra.mxu0 %v1019
    %1454 = vmatprep.subr.bf16.mxu0 %v1024
    %1455 = vmatpush1.bf16.msra.mxu0 %v1023
    %1456 = vmatprep.subr.bf16.mxu0 %v1028
    %1457 = vmatpush1.bf16.msra.mxu0 %v1027
    %1458 = vmatprep.subr.bf16.mxu0 %v1032
    %1459 = vmatpush1.bf16.msra.mxu0 %v1031
    %1460 = vmatprep.subr.bf16.mxu0 %v1036
    %1461 = vmatpush1.bf16.msra.mxu0 %v1035
    %1462 = vmatprep.subr.bf16.mxu0 %v1040
    %1463 = vmatpush1.bf16.msra.mxu0 %v1039
    %1464 = vmatprep.subr.bf16.mxu0 %v1044
    %1465 = vmatpush1.bf16.msra.mxu0 %v1043
    %1466 = vmatprep.subr.bf16.mxu0 %v1048
    %1467 = vmatpush1.bf16.msra.mxu0 %v1047
    %1468 = vmatprep.subr.bf16.mxu0 %v1052
    %1469 = vmatpush1.bf16.msra.mxu0 %v1051
    %1470 = vmatprep.mubr.bf16.mxu0 %v323
    %1471 = vmatmul.mubr.bf16.gmra.mrb[0].mxu0 %v322
    %v1472 = vpop.f32.mrb[0].mxu0
    %v1473 = vadd.f32 %v500, %v1472
    %v1474 = vpop.f32.mrb[0].mxu0
    %v1475 = vadd.f32 %v504, %v1474
    %v1476 = vpop.f32.mrb[0].mxu0
    %v1477 = vadd.f32 %v500, %v1476
    %v1478 = vpop.f32.mrb[0].mxu0
    %v1479 = vadd.f32 %v504, %v1478
    %1480 = vdwg.mxu0
    %1481 = vmatprep.subr.bf16.mxu0 %v1056
    %1482 = vmatpush1.bf16.msra.mxu0 %v1055
    %1483 = vmatprep.subr.bf16.mxu0 %v1060
    %1484 = vmatpush1.bf16.msra.mxu0 %v1059
    %1485 = vmatprep.subr.bf16.mxu0 %v1064
    %1486 = vmatpush1.bf16.msra.mxu0 %v1063
    %1487 = vmatprep.subr.bf16.mxu0 %v1068
    %1488 = vmatpush1.bf16.msra.mxu0 %v1067
    %1489 = vmatprep.subr.bf16.mxu0 %v1072
    %1490 = vmatpush1.bf16.msra.mxu0 %v1071
    %1491 = vmatprep.subr.bf16.mxu0 %v1076
    %1492 = vmatpush1.bf16.msra.mxu0 %v1075
    %1493 = vmatprep.subr.bf16.mxu0 %v1080
    %1494 = vmatpush1.bf16.msra.mxu0 %v1079
    %1495 = vmatprep.subr.bf16.mxu0 %v1084
    %1496 = vmatpush1.bf16.msra.mxu0 %v1083
    %1497 = vmatprep.subr.bf16.mxu0 %v1088
    %1498 = vmatpush1.bf16.msra.mxu0 %v1087
    %1499 = vmatprep.subr.bf16.mxu0 %v1092
    %1500 = vmatpush1.bf16.msra.mxu0 %v1091
    %1501 = vmatprep.subr.bf16.mxu0 %v1096
    %1502 = vmatpush1.bf16.msra.mxu0 %v1095
    %1503 = vmatprep.subr.bf16.mxu0 %v1100
    %1504 = vmatpush1.bf16.msra.mxu0 %v1099
    %1505 = vmatprep.subr.bf16.mxu0 %v1104
    %1506 = vmatpush1.bf16.msra.mxu0 %v1103
    %1507 = vmatprep.subr.bf16.mxu0 %v1108
    %1508 = vmatpush1.bf16.msra.mxu0 %v1107
    %1509 = vmatprep.subr.bf16.mxu0 %v1112
    %1510 = vmatpush1.bf16.msra.mxu0 %v1111
    %1511 = vmatprep.subr.bf16.mxu0 %v1116
    %1512 = vmatpush1.bf16.msra.mxu0 %v1115
    %1513 = vmatprep.mubr.bf16.mxu0 %v325
    %1514 = vmatmul.mubr.bf16.gmra.mrb[0].mxu0 %v324
    %v1515 = vpop.f32.mrb[0].mxu0
    %v1516 = vadd.f32 %v1473, %v1515
    %v1517 = vpop.f32.mrb[0].mxu0
    %v1518 = vadd.f32 %v1475, %v1517
    %v1519 = vpop.f32.mrb[0].mxu0
    %v1520 = vadd.f32 %v1477, %v1519
    %v1521 = vpop.f32.mrb[0].mxu0
    %v1522 = vadd.f32 %v1479, %v1521
    %1523 = vdwg.mxu0
    %1524 = vmatprep.subr.bf16.mxu0 %v1120
    %1525 = vmatpush1.bf16.msra.mxu0 %v1119
    %1526 = vmatprep.subr.bf16.mxu0 %v1124
    %1527 = vmatpush1.bf16.msra.mxu0 %v1123
    %1528 = vmatprep.subr.bf16.mxu0 %v1128
    %1529 = vmatpush1.bf16.msra.mxu0 %v1127
    %1530 = vmatprep.subr.bf16.mxu0 %v1132
    %1531 = vmatpush1.bf16.msra.mxu0 %v1131
    %1532 = vmatprep.subr.bf16.mxu0 %v1136
    %1533 = vmatpush1.bf16.msra.mxu0 %v1135
    %1534 = vmatprep.subr.bf16.mxu0 %v1140
    %1535 = vmatpush1.bf16.msra.mxu0 %v1139
    %1536 = vmatprep.subr.bf16.mxu0 %v1144
    %1537 = vmatpush1.bf16.msra.mxu0 %v1143
    %1538 = vmatprep.subr.bf16.mxu0 %v1148
    %1539 = vmatpush1.bf16.msra.mxu0 %v1147
    %1540 = vmatprep.subr.bf16.mxu0 0
    %1541 = vmatpush1.bf16.msra.mxu0 0
    %1542 = vmatprep.subr.bf16.mxu0 0
    %1543 = vmatpush1.bf16.msra.mxu0 0
    %1544 = vmatprep.subr.bf16.mxu0 0
    %1545 = vmatpush1.bf16.msra.mxu0 0
    %1546 = vmatprep.subr.bf16.mxu0 0
    %1547 = vmatpush1.bf16.msra.mxu0 0
    %1548 = vmatprep.subr.bf16.mxu0 0
    %1549 = vmatpush1.bf16.msra.mxu0 0
    %1550 = vmatprep.subr.bf16.mxu0 0
    %1551 = vmatpush1.bf16.msra.mxu0 0
    %1552 = vmatprep.subr.bf16.mxu0 0
    %1553 = vmatpush1.bf16.msra.mxu0 0
    %1554 = vmatprep.subr.bf16.mxu0 0
    %1555 = vmatpush1.bf16.msra.mxu0 0
    %1556 = vmatprep.mubr.bf16.mxu0 0
    %1557 = vmatmul.mubr.bf16.gmra.mrb[0].mxu0 %v326
    %v1558 = vpop.f32.mrb[0].mxu0
    %v1559 = vadd.f32 %v1516, %v1558
    %v1560 = vpop.f32.mrb[0].mxu0
    %v1561 = vadd.f32 %v1518, %v1560
    %v1562 = vpop.f32.mrb[0].mxu0
    %v1563 = vadd.f32 %v1520, %v1562
    %v1564 = vpop.f32.mrb[0].mxu0
    %v1565 = vadd.f32 %v1522, %v1564
    %1566 = vdwg.mxu0
    %v1567 = vtanh.pop %v1430
    %v1568 = vtanh.pop %v1432
    %v1569 = vtanh.pop %v1559
    %v1570 = vtanh.pop %v1561
    %v1571 = vtanh.pop %v1434
    %v1572 = vtanh.pop %v1436
    %v1573 = vtanh.pop %v1563
    %v1574 = vtanh.pop %v1565
    %v1575 = vpack.c.bf16 %v1571, %v1567
    %v1576 = vpack.c.bf16 %v1572, %v1568
    %v1577 = vpack.c.bf16 %v1573, %v1569
    %v1578 = vpack.c.bf16 %v1574, %v1570
    %v1579 = vld [vmem:[#allocation8] sm:$0xf]
    %v1580 = vld [vmem:[#allocation8 + $0x4] sm:$0xf]
    %v1581 = vld [vmem:[#allocation8 + $0x8] sm:$0xf]
    %v1582 = vld [vmem:[#allocation8 + $0xc] sm:$0xf]
    %v1583 = vld [vmem:[#allocation8 + $0x10] sm:$0xf]
    %v1584 = vld [vmem:[#allocation8 + $0x14] sm:$0xf]
    %v1585 = vld [vmem:[#allocation8 + $0x18] sm:$0xf]
    %v1586 = vld [vmem:[#allocation8 + $0x1c] sm:$0xf]
    %v1587 = vld [vmem:[#allocation8 + $0x20] sm:$0xf]
    %v1588 = vld [vmem:[#allocation8 + $0x24] sm:$0xf]
    %v1589 = vld [vmem:[#allocation8 + $0x28] sm:$0xf]
    %v1590 = vld [vmem:[#allocation8 + $0x2c] sm:$0xf]
    %v1591 = vld [vmem:[#allocation8 + $0x30] sm:$0xf]
    %v1592 = vld [vmem:[#allocation8 + $0x34] sm:$0xf]
    %v1593 = vld [vmem:[#allocation8 + $0x38] sm:$0xf]
    %v1594 = vld [vmem:[#allocation8 + $0x3c] sm:$0xf]
    %v1595 = vld [vmem:[#allocation8 + $0x40] sm:$0xf]
    %v1596 = vld [vmem:[#allocation8 + $0x44] sm:$0xf]
    %v1597 = vld [vmem:[#allocation8 + $0x48] sm:$0xf]
    %v1598 = vld [vmem:[#allocation8 + $0x4c] sm:$0xf]
    %v1599 = vld [vmem:[#allocation8 + $0x50] sm:$0xf]
    %v1600 = vld [vmem:[#allocation8 + $0x54] sm:$0xf]
    %v1601 = vld [vmem:[#allocation8 + $0x58] sm:$0xf]
    %v1602 = vld [vmem:[#allocation8 + $0x5c] sm:$0xf]
    %v1603 = vld [vmem:[#allocation8 + $0x60] sm:$0xf]
    %v1604 = vld [vmem:[#allocation8 + $0x64] sm:$0xf]
    %v1605 = vld [vmem:[#allocation8 + $0x68] sm:$0xf]
    %v1606 = vld [vmem:[#allocation8 + $0x6c] sm:$0xf]
    %v1607 = vld [vmem:[#allocation8 + $0x70] sm:$0xf]
    %v1608 = vld [vmem:[#allocation8 + $0x74] sm:$0xf]
    %v1609 = vld [vmem:[#allocation8 + $0x78] sm:$0xf]
    %v1610 = vld [vmem:[#allocation8 + $0x7c] sm:$0xf]
    %v1611 = vld [vmem:[#allocation8 + $0x80] sm:$0xf]
    %v1612 = vld [vmem:[#allocation8 + $0x84] sm:$0xf]
    %v1613 = vld [vmem:[#allocation8 + $0x88] sm:$0xf]
    %v1614 = vld [vmem:[#allocation8 + $0x8c] sm:$0xf]
    %v1615 = vld [vmem:[#allocation8 + $0x90] sm:$0xf]
    %v1616 = vld [vmem:[#allocation8 + $0x94] sm:$0xf]
    %v1617 = vld [vmem:[#allocation8 + $0x98] sm:$0xf]
    %v1618 = vld [vmem:[#allocation8 + $0x9c] sm:$0xf]
    %v1619 = vld [vmem:[#allocation8 + $0xa0] sm:$0xf]
    %v1620 = vld [vmem:[#allocation8 + $0xa4] sm:$0xf]
    %v1621 = vld [vmem:[#allocation8 + $0xa8] sm:$0xf]
    %v1622 = vld [vmem:[#allocation8 + $0xac] sm:$0xf]
    %v1623 = vld [vmem:[#allocation8 + $0xb0] sm:$0xf]
    %v1624 = vld [vmem:[#allocation8 + $0xb4] sm:$0xf]
    %v1625 = vld [vmem:[#allocation8 + $0xb8] sm:$0xf]
    %v1626 = vld [vmem:[#allocation8 + $0xbc] sm:$0xf]
    %v1627 = vld [vmem:[#allocation8 + $0xc0] sm:$0xf]
    %v1628 = vld [vmem:[#allocation8 + $0xc4] sm:$0xf]
    %v1629 = vld [vmem:[#allocation8 + $0xc8] sm:$0xf]
    %v1630 = vld [vmem:[#allocation8 + $0xcc] sm:$0xf]
    %v1631 = vld [vmem:[#allocation8 + $0xd0] sm:$0xf]
    %v1632 = vld [vmem:[#allocation8 + $0xd4] sm:$0xf]
    %v1633 = vld [vmem:[#allocation8 + $0xd8] sm:$0xf]
    %v1634 = vld [vmem:[#allocation8 + $0xdc] sm:$0xf]
    %v1635 = vld [vmem:[#allocation8 + $0xe0] sm:$0xf]
    %v1636 = vld [vmem:[#allocation8 + $0xe4] sm:$0xf]
    %v1637 = vld [vmem:[#allocation8 + $0xe8] sm:$0xf]
    %v1638 = vld [vmem:[#allocation8 + $0xec] sm:$0xf]
    %v1639 = vld [vmem:[#allocation8 + $0xf0] sm:$0xf]
    %v1640 = vld [vmem:[#allocation8 + $0xf4] sm:$0xf]
    %v1641 = vld [vmem:[#allocation8 + $0xf8] sm:$0xf]
    %v1642 = vld [vmem:[#allocation8 + $0xfc] sm:$0xf]
    %v1643 = vld [vmem:[%s6] sm:$0x1]
    %v1645 = vlaneseq
    %v1646 = vshrl.u32 %v1645, 7
    %v1647 = vsub.s32 0, %v1646
    %v1648 = vrot.slane %v1643, %v1647
    %v1714 = vunpack.c.l.b16 %v1579
    %v1715 = vunpack.c.l.b16 %v1580
    %v1716 = vunpack.c.l.b16 %v1581
    %v1717 = vunpack.c.l.b16 %v1582
    %v1718 = vunpack.c.l.b16 %v1583
    %v1719 = vunpack.c.l.b16 %v1584
    %v1720 = vunpack.c.l.b16 %v1585
    %v1721 = vunpack.c.l.b16 %v1586
    %v1722 = vunpack.c.l.b16 %v1587
    %v1723 = vunpack.c.l.b16 %v1588
    %v1724 = vunpack.c.l.b16 %v1589
    %v1725 = vunpack.c.l.b16 %v1590
    %v1726 = vunpack.c.l.b16 %v1591
    %v1727 = vunpack.c.l.b16 %v1592
    %v1728 = vunpack.c.l.b16 %v1593
    %v1729 = vunpack.c.l.b16 %v1594
    %v1730 = vunpack.c.l.b16 %v1595
    %v1731 = vunpack.c.l.b16 %v1596
    %v1732 = vunpack.c.l.b16 %v1597
    %v1733 = vunpack.c.l.b16 %v1598
    %v1734 = vunpack.c.l.b16 %v1599
    %v1735 = vunpack.c.l.b16 %v1600
    %v1736 = vunpack.c.l.b16 %v1601
    %v1737 = vunpack.c.l.b16 %v1602
    %v1738 = vunpack.c.l.b16 %v1603
    %v1739 = vunpack.c.l.b16 %v1604
    %v1740 = vunpack.c.l.b16 %v1605
    %v1741 = vunpack.c.l.b16 %v1606
    %v1742 = vunpack.c.l.b16 %v1607
    %v1743 = vunpack.c.l.b16 %v1608
    %v1744 = vunpack.c.l.b16 %v1609
    %v1745 = vunpack.c.l.b16 %v1610
    %v1746 = vunpack.c.l.b16 %v1611
    %v1747 = vunpack.c.l.b16 %v1612
    %v1748 = vunpack.c.l.b16 %v1613
    %v1749 = vunpack.c.l.b16 %v1614
    %v1750 = vunpack.c.l.b16 %v1615
    %v1751 = vunpack.c.l.b16 %v1616
    %v1752 = vunpack.c.l.b16 %v1617
    %v1753 = vunpack.c.l.b16 %v1618
    %v1754 = vunpack.c.l.b16 %v1619
    %v1755 = vunpack.c.l.b16 %v1620
    %v1756 = vunpack.c.l.b16 %v1621
    %v1757 = vunpack.c.l.b16 %v1622
    %v1758 = vunpack.c.l.b16 %v1623
    %v1759 = vunpack.c.l.b16 %v1624
    %v1760 = vunpack.c.l.b16 %v1625
    %v1761 = vunpack.c.l.b16 %v1626
    %v1762 = vunpack.c.l.b16 %v1627
    %v1763 = vunpack.c.l.b16 %v1628
    %v1764 = vunpack.c.l.b16 %v1629
    %v1765 = vunpack.c.l.b16 %v1630
    %v1766 = vunpack.c.l.b16 %v1631
    %v1767 = vunpack.c.l.b16 %v1632
    %v1768 = vunpack.c.l.b16 %v1633
    %v1769 = vunpack.c.l.b16 %v1634
    %v1770 = vunpack.c.l.b16 %v1635
    %v1771 = vunpack.c.l.b16 %v1636
    %v1772 = vunpack.c.l.b16 %v1637
    %v1773 = vunpack.c.l.b16 %v1638
    %v1774 = vunpack.c.l.b16 %v1639
    %v1775 = vunpack.c.l.b16 %v1640
    %v1776 = vunpack.c.l.b16 %v1641
    %v1777 = vunpack.c.l.b16 %v1642
    %v1778 = vpack.c.b16 %v1715, %v1714
    %v1779 = vpack.c.b16 %v1717, %v1716
    %v1780 = vpack.c.b16 %v1719, %v1718
    %v1781 = vpack.c.b16 %v1721, %v1720
    %v1782 = vpack.c.b16 %v1723, %v1722
    %v1783 = vpack.c.b16 %v1725, %v1724
    %v1784 = vpack.c.b16 %v1727, %v1726
    %v1785 = vpack.c.b16 %v1729, %v1728
    %v1786 = vpack.c.b16 %v1731, %v1730
    %v1787 = vpack.c.b16 %v1733, %v1732
    %v1788 = vpack.c.b16 %v1735, %v1734
    %v1789 = vpack.c.b16 %v1737, %v1736
    %v1790 = vpack.c.b16 %v1739, %v1738
    %v1791 = vpack.c.b16 %v1741, %v1740
    %v1792 = vpack.c.b16 %v1743, %v1742
    %v1793 = vpack.c.b16 %v1745, %v1744
    %v1794 = vpack.c.b16 %v1747, %v1746
    %v1795 = vpack.c.b16 %v1749, %v1748
    %v1796 = vpack.c.b16 %v1751, %v1750
    %v1797 = vpack.c.b16 %v1753, %v1752
    %v1798 = vpack.c.b16 %v1755, %v1754
    %v1799 = vpack.c.b16 %v1757, %v1756
    %v1800 = vpack.c.b16 %v1759, %v1758
    %v1801 = vpack.c.b16 %v1761, %v1760
    %v1802 = vpack.c.b16 %v1763, %v1762
    %v1803 = vpack.c.b16 %v1765, %v1764
    %v1804 = vpack.c.b16 %v1767, %v1766
    %v1805 = vpack.c.b16 %v1769, %v1768
    %v1806 = vpack.c.b16 %v1771, %v1770
    %v1807 = vpack.c.b16 %v1773, %v1772
    %v1808 = vpack.c.b16 %v1775, %v1774
    %v1809 = vpack.c.b16 %v1777, %v1776
    %1842 = vmatprep.subr.bf16.mxu0 0
    %1843 = vmatpush1.bf16.msra.mxu0 %v1778
    %1844 = vmatprep.subr.bf16.mxu0 0
    %1845 = vmatpush1.bf16.msra.mxu0 %v1779
    %1846 = vmatprep.subr.bf16.mxu0 0
    %1847 = vmatpush1.bf16.msra.mxu0 %v1780
    %1848 = vmatprep.subr.bf16.mxu0 0
    %1849 = vmatpush1.bf16.msra.mxu0 %v1781
    %1850 = vmatprep.subr.bf16.mxu0 0
    %1851 = vmatpush1.bf16.msra.mxu0 %v1782
    %1852 = vmatprep.subr.bf16.mxu0 0
    %1853 = vmatpush1.bf16.msra.mxu0 %v1783
    %1854 = vmatprep.subr.bf16.mxu0 0
    %1855 = vmatpush1.bf16.msra.mxu0 %v1784
    %1856 = vmatprep.subr.bf16.mxu0 0
    %1857 = vmatpush1.bf16.msra.mxu0 %v1785
    %1858 = vmatprep.subr.bf16.mxu0 0
    %1859 = vmatpush1.bf16.msra.mxu0 %v1786
    %1860 = vmatprep.subr.bf16.mxu0 0
    %1861 = vmatpush1.bf16.msra.mxu0 %v1787
    %1862 = vmatprep.subr.bf16.mxu0 0
    %1863 = vmatpush1.bf16.msra.mxu0 %v1788
    %1864 = vmatprep.subr.bf16.mxu0 0
    %1865 = vmatpush1.bf16.msra.mxu0 %v1789
    %1866 = vmatprep.subr.bf16.mxu0 0
    %1867 = vmatpush1.bf16.msra.mxu0 %v1790
    %1868 = vmatprep.subr.bf16.mxu0 0
    %1869 = vmatpush1.bf16.msra.mxu0 %v1791
    %1870 = vmatprep.subr.bf16.mxu0 0
    %1871 = vmatpush1.bf16.msra.mxu0 %v1792
    %1872 = vmatprep.subr.bf16.mxu0 0
    %1873 = vmatpush1.bf16.msra.mxu0 %v1793
    %1874 = vmatprep.mubr.bf16.mxu0 %v1576
    %1875 = vmatmul.mubr.bf16.gmra.mrb[0].mxu0 %v1575
    %v1876 = vpop.f32.mrb[0].mxu0
    %v1877 = vadd.f32 %v1648, %v1876
    %v1878 = vpop.f32.mrb[0].mxu0
    %v1879 = vpop.f32.mrb[0].mxu0
    %v1880 = vadd.f32 %v1648, %v1879
    %v1881 = vpop.f32.mrb[0].mxu0
    %1882 = vdwg.mxu0
    %1883 = vmatprep.subr.bf16.mxu0 0
    %1884 = vmatpush1.bf16.msra.mxu0 %v1794
    %1885 = vmatprep.subr.bf16.mxu0 0
    %1886 = vmatpush1.bf16.msra.mxu0 %v1795
    %1887 = vmatprep.subr.bf16.mxu0 0
    %1888 = vmatpush1.bf16.msra.mxu0 %v1796
    %1889 = vmatprep.subr.bf16.mxu0 0
    %1890 = vmatpush1.bf16.msra.mxu0 %v1797
    %1891 = vmatprep.subr.bf16.mxu0 0
    %1892 = vmatpush1.bf16.msra.mxu0 %v1798
    %1893 = vmatprep.subr.bf16.mxu0 0
    %1894 = vmatpush1.bf16.msra.mxu0 %v1799
    %1895 = vmatprep.subr.bf16.mxu0 0
    %1896 = vmatpush1.bf16.msra.mxu0 %v1800
    %1897 = vmatprep.subr.bf16.mxu0 0
    %1898 = vmatpush1.bf16.msra.mxu0 %v1801
    %1899 = vmatprep.subr.bf16.mxu0 0
    %1900 = vmatpush1.bf16.msra.mxu0 %v1802
    %1901 = vmatprep.subr.bf16.mxu0 0
    %1902 = vmatpush1.bf16.msra.mxu0 %v1803
    %1903 = vmatprep.subr.bf16.mxu0 0
    %1904 = vmatpush1.bf16.msra.mxu0 %v1804
    %1905 = vmatprep.subr.bf16.mxu0 0
    %1906 = vmatpush1.bf16.msra.mxu0 %v1805
    %1907 = vmatprep.subr.bf16.mxu0 0
    %1908 = vmatpush1.bf16.msra.mxu0 %v1806
    %1909 = vmatprep.subr.bf16.mxu0 0
    %1910 = vmatpush1.bf16.msra.mxu0 %v1807
    %1911 = vmatprep.subr.bf16.mxu0 0
    %1912 = vmatpush1.bf16.msra.mxu0 %v1808
    %1913 = vmatprep.subr.bf16.mxu0 0
    %1914 = vmatpush1.bf16.msra.mxu0 %v1809
    %1915 = vmatprep.mubr.bf16.mxu0 %v1578
    %1916 = vmatmul.mubr.bf16.gmra.mrb[0].mxu0 %v1577
    %v1917 = vpop.f32.mrb[0].mxu0
    %v1918 = vadd.f32 %v1877, %v1917
    %v1919 = vpop.f32.mrb[0].mxu0
    %v1920 = vpop.f32.mrb[0].mxu0
    %v1921 = vadd.f32 %v1880, %v1920
    %v1922 = vpop.f32.mrb[0].mxu0
    %1923 = vdwg.mxu0
    %v1924 = vtanh.pop %v1918
    %v1925 = vtanh.pop %v1921
    %1926 = vst [vmem:[#allocation10] sm:$0xff] %v1924
    %1927 = vst [vmem:[#allocation10 + $0x8] sm:$0xff] %v1925
    // Predicated region
    $region46: #{tpu_custom_call.1} parent=1 // pred_check
      _
    $region47: #{tpu_custom_call.1} parent=1 // pred_check_branch
      %1929 = sbr.rel (0) target = $region49
    $region48: #{tpu_custom_call.1} parent=1 // pred_region
      %s1931 = ssub.s32 256, 256
      %1932 = vsyncadd [#allocation4], %s1931
      %s1933 = sshll.u32 [#allocation10], 4
      %s1934 = int_to_ptr.vmem [resolvable:$true] %s1933
      %1939 = dma.vmem_to_hbm [thread:$0]  %s1934, 256, %s7, [#allocation4], 128, 128, 8
    $region49: #{tpu_custom_call.1} parent=1 // pred_fallthru
      _
    // Predicated region
    $region50: #{tpu_custom_call.1} parent=1 // pred_check
      _
    $region51: #{tpu_custom_call.1} parent=1 // pred_check_branch
      %1941 = sbr.rel (0) target = $region53
    $region52: #{tpu_custom_call.1} parent=1 // pred_region
      %1942 = dma.done [#allocation4], 256
    $region53: #{tpu_custom_call.1} parent=1 // pred_fallthru
      _
    %1943 = vsyncpa [#allocation3], 1
    %1944 = vsyncpa [#allocation6], 1
    %1945 = vsyncpa [#allocation9], 1
    %1946 = vsyncpa [#allocation4], 1

</llo_original>
